<compile_context>
chip_gen: v7x
topology: tpu7x:2x2x1
jax: 0.10.0
libtpu: 0.0.40
codegen_flags: <defaults>
</compile_context>

<pallas_src>
import functools

import numpy as np
import jax
import jax.numpy as jnp
from jax.experimental import pallas as pl
from jax.experimental.pallas import tpu as pltpu

CH1 = 8      # encoder conv1 / decoder conv1 channel width
CH2 = 16     # bottleneck channel width
_HIGHEST = jax.lax.Precision.HIGHEST


# ------------------------------ fused Pallas kernel ---------------------------------

def _cae_fused_kernel(x_ref, c_ref, s_ref, w_ref, d_ref, e_ref, out_ref,
                      *, N, C, H, W, latent, c_dim):
  f32 = jnp.float32
  H2, W2, Hq, Wq = H // 2, W // 2, H // 4, W // 4
  L0 = N * C * W            # conv1 input lane width   (128 at the toy sizes)
  L1 = N * CH1 * W2         # conv1 out / conv2 in     (128)
  L2 = N * CH2 * Wq         # conv2 out / bottleneck   (128)
  NL, NCD = N * latent, N * c_dim

  # static row offsets into the packed operand slabs (must match prepare_operands)
  s1_r0 = 0
  s2_r0 = s1_r0 + 3 * H2
  s3_r0 = s2_r0 + 3 * Hq
  s4_r0 = s3_r0 + 3 * H2
  w1_r0 = 0
  w2_r0 = w1_r0 + 3 * L0
  w3_r0 = w2_r0 + 3 * L1
  w4_r0 = w3_r0 + 3 * L2
  b_r0 = w4_r0 + 3 * L1     # four conv bias rows
  bd_r0 = b_r0 + 4          # decoder-FC bias map (Hq rows)

  def conv(x, s_r0, ho, hi, w_r0, b_row, width):
    # 3x3 conv (pad=1; stride / nearest-2x-upsample folded into S / W) as 4 MXU dots:
    #   T = S_stack @ x  (single stacked height-selection dot), then
    #   y = sum_ky T[ky*Ho:(ky+1)*Ho] @ W_ky + bias_row
    krows = x.shape[1]
    S = s_ref[s_r0:s_r0 + 3 * ho, 0:hi]                           # (3*Ho, Hi)
    T = jnp.dot(S, x, preferred_element_type=f32)                 # (3*Ho, krows)
    acc = jnp.dot(T[0:ho, :], w_ref[w_r0:w_r0 + krows, 0:width],
                  preferred_element_type=f32)
    acc = acc + jnp.dot(T[ho:2 * ho, :],
                        w_ref[w_r0 + krows:w_r0 + 2 * krows, 0:width],
                        preferred_element_type=f32)
    acc = acc + jnp.dot(T[2 * ho:3 * ho, :],
                        w_ref[w_r0 + 2 * krows:w_r0 + 3 * krows, 0:width],
                        preferred_element_type=f32)
    return acc + w_ref[b_row:b_row + 1, 0:width]

  x0 = x_ref[...]                                                 # (H, L0) lane-dense
  cw = c_ref[...]                                                 # (1, N*c_dim)

  # --- encoder --------------------------------------------------------------------
  y1 = jnp.maximum(conv(x0, s1_r0, H2, H, w1_r0, b_r0 + 0, L1), 0.0)    # (H2, L1)
  y2 = jnp.maximum(conv(y1, s2_r0, Hq, H2, w2_r0, b_r0 + 1, L2), 0.0)   # (Hq, L2)

  # encoder FC: flatten folded into the matmul by lane-concatenating the Hq rows
  y2rows = jnp.concatenate([y2[oy:oy + 1, :] for oy in range(Hq)], axis=1)   # (1, Hq*L2)
  z = jnp.dot(y2rows, e_ref[0:Hq * L2, :], preferred_element_type=f32)       # (1, NL)
  z = z + jnp.dot(cw, e_ref[Hq * L2:Hq * L2 + NCD, :], preferred_element_type=f32)
  z = z + e_ref[Hq * L2 + NCD:Hq * L2 + NCD + 1, :]

  # --- decoder --------------------------------------------------------------------
  # decoder FC produces the flattened row G, then scatters it onto the (Hq, L2) map
  # with sublane masks (no un-flatten copy loops, no scratch).
  G = (jnp.dot(z, d_ref[0:NL, :], preferred_element_type=f32)
       + jnp.dot(cw, d_ref[NL:NL + NCD, :], preferred_element_type=f32))     # (1, Hq*L2)
  rid = jax.lax.broadcasted_iota(jnp.int32, (Hq, L2), 0)
  xd = w_ref[bd_r0:bd_r0 + Hq, 0:L2]                                         # bias map
  for oy in range(Hq):
    xd = xd + jnp.where(rid == oy, G[:, oy * L2:(oy + 1) * L2], 0.0)
  xd = jnp.maximum(xd, 0.0)                                                  # (Hq, L2)

  y3 = jnp.maximum(conv(xd, s3_r0, H2, Hq, w3_r0, b_r0 + 2, L1), 0.0)        # (H2, L1)
  y4 = conv(y3, s4_r0, H, H2, w4_r0, b_r0 + 3, L0)                           # (H,  L0)
  out_ref[...] = pl.reciprocal(1.0 + jnp.exp(-y4), approx=True)              # sigmoid (EUP)


# ------------------------- structured-matrix weight preparation -----------------------
# (runs once, off the hot path: pure layout plumbing of the PyTorch-style weights)

def prepare_operands(params, N, C, H, W, latent, c_dim):
  assert H % 4 == 0 and W % 4 == 0
  H2, W2, Hq, Wq = H // 2, W // 2, H // 4, W // 4
  L0, L1, L2 = N * C * W, N * CH1 * W2, N * CH2 * Wq
  NL, NCD = N * latent, N * c_dim

  def conv_blocks(w, b, Cin, Cout, Hi, Wi, stride, up):
    """3x3/pad-1 conv (optionally preceded by nearest 2x upsample) as structured matrices
    acting on activations laid out X[height, (n, ci, x)]."""
    w = np.asarray(w, np.float32)
    b = np.asarray(b, np.float32)
    KH = KW = 3
    Ho = (Hi * up + 2 - KH) // stride + 1
    Wo = (Wi * up + 2 - KW) // stride + 1
    S = np.zeros((KH * Ho, Hi), np.float32)                 # stacked height selection
    for ky in range(KH):
      for oy in range(Ho):
        h_in = stride * oy + ky - 1
        if 0 <= h_in < Hi * up:
          S[ky * Ho + oy, h_in // up] = 1.0
    A = np.zeros((Wi, Wo, KW), np.float32)                  # width structure
    for ox in range(Wo):
      for kx in range(KW):
        w_in = stride * ox + kx - 1
        if 0 <= w_in < Wi * up:
          A[w_in // up, ox, kx] = 1.0
    Wk = np.zeros((KH, N * Cin * Wi, N * Cout * Wo), np.float32)
    for ky in range(KH):
      blk = np.einsum('xok,cik->ixco', A, w[:, :, ky, :]).reshape(Cin * Wi, Cout * Wo)
      for n in range(N):                                    # block-diagonal over batch
        Wk[ky, n * Cin * Wi:(n + 1) * Cin * Wi,
           n * Cout * Wo:(n + 1) * Cout * Wo] = blk
    b_row = np.tile(np.repeat(b, Wo), N)[None, :]           # (1, N*Cout*Wo)
    return S, Wk.reshape(KH * N * Cin * Wi, N * Cout * Wo), b_row

  S1, cw1, cb1 = conv_blocks(params['e_conv1_w'], params['e_conv1_b'], C,   CH1, H,  W,  2, 1)
  S2, cw2, cb2 = conv_blocks(params['e_conv2_w'], params['e_conv2_b'], CH1, CH2, H2, W2, 2, 1)
  S3, cw3, cb3 = conv_blocks(params['d_conv1_w'], params['d_conv1_b'], CH2, CH1, Hq, Wq, 1, 2)
  S4, cw4, cb4 = conv_blocks(params['d_conv2_w'], params['d_conv2_b'], CH1, C,   H2, W2, 1, 2)

  # --- FC weights re-laid-out for the (height, batch*channel*width) activation layout ---
  weh = np.asarray(params['e_fc_w_h'], np.float32)
  wec = np.asarray(params['e_fc_w_c'], np.float32)
  be = np.asarray(params['e_fc_b'], np.float32)
  wdz = np.asarray(params['d_fc_w_z'], np.float32)
  wdc = np.asarray(params['d_fc_w_c'], np.float32)
  bd = np.asarray(params['d_fc_b'], np.float32)

  WEh = np.zeros((Hq * L2, NL), np.float32)
  WDz = np.zeros((NL, Hq * L2), np.float32)
  WDc = np.zeros((NCD, Hq * L2), np.float32)
  bdf = np.zeros((Hq, L2), np.float32)
  for n in range(N):
    for oy in range(Hq):
      for ci in range(CH2):
        for ox in range(Wq):
          src = (ci * Hq + oy) * Wq + ox                    # PyTorch NCHW flatten index
          lane = n * CH2 * Wq + ci * Wq + ox
          WEh[oy * L2 + lane, n * latent:(n + 1) * latent] = weh[src, :]
          WDz[n * latent:(n + 1) * latent, oy * L2 + lane] = wdz[:, src]
          WDc[n * c_dim:(n + 1) * c_dim, oy * L2 + lane] = wdc[:, src]
          bdf[oy, lane] = bd[src]
  WEc = np.zeros((NCD, NL), np.float32)
  bew = np.zeros((1, NL), np.float32)
  for n in range(N):
    WEc[n * c_dim:(n + 1) * c_dim, n * latent:(n + 1) * latent] = wec
    bew[0, n * latent:(n + 1) * latent] = be

  # --- pack everything into 4 slabs (6 input DMAs total, instead of 20+) ----------------
  s_list = [S1, S2, S3, S4]
  s_pack = np.zeros((sum(s.shape[0] for s in s_list),
                     max(s.shape[1] for s in s_list)), np.float32)
  r = 0
  for s in s_list:
    s_pack[r:r + s.shape[0], 0:s.shape[1]] = s
    r += s.shape[0]

  wmax = max(L0, L1, L2)
  w_rows = 3 * L0 + 3 * L1 + 3 * L2 + 3 * L1 + 4 + Hq
  w_pack = np.zeros((w_rows, wmax), np.float32)
  r = 0
  for blk in (cw1, cw2, cw3, cw4):
    w_pack[r:r + blk.shape[0], 0:blk.shape[1]] = blk
    r += blk.shape[0]
  for brow in (cb1, cb2, cb3, cb4):
    w_pack[r, 0:brow.shape[1]] = brow[0]
    r += 1
  w_pack[r:r + Hq, 0:L2] = bdf

  d_pack = np.concatenate([WDz, WDc], axis=0)               # (NL+NCD, Hq*L2)
  e_pack = np.concatenate([WEh, WEc, bew], axis=0)          # (Hq*L2+NCD+1, NL)

  return (jnp.asarray(s_pack), jnp.asarray(w_pack),
          jnp.asarray(d_pack), jnp.asarray(e_pack))


# ----------------------------------- pallas wrapper -----------------------------------

@jax.jit
def cae_apply(operands, x, c):
  s_pack, w_pack, d_pack, e_pack = operands
  N, C, H, W = x.shape
  c_dim = c.shape[1]
  latent = e_pack.shape[1] // N

  # Lane-dense I/O: layout plumbing stays in the wrapper (XLA, HBM side).
  x_in = x.transpose(2, 0, 1, 3).reshape(H, N * C * W)      # (H, N*C*W) = 128 lanes
  c_in = c.reshape(1, N * c_dim)

  kernel = functools.partial(_cae_fused_kernel, N=N, C=C, H=H, W=W,
                             latent=latent, c_dim=c_dim)
  vmem = pltpu.MemorySpace.VMEM
  out_int = pl.pallas_call(
      kernel,
      out_shape=jax.ShapeDtypeStruct((H, N * C * W), jnp.float32),
      in_specs=[pl.BlockSpec(memory_space=vmem)] * 6,
      out_specs=pl.BlockSpec(memory_space=vmem),
  )(x_in, c_in, s_pack, w_pack, d_pack, e_pack)
  # NOTE: a single gridless invocation is right for batch=2 (latency/overhead bound).
  # For large batches, tile N with grid + dimension_semantics=("parallel",) so v7x's two
  # TensorCores split the work, and re-check the working set against its 64 MiB VMEM.
  return out_int.reshape(H, N, C, W).transpose(1, 2, 0, 3)


# --------------------------------- parameter init -------------------------------------

def _uniform(key, shape, fan_in):
  bound = 1.0 / np.sqrt(float(fan_in))
  return jax.random.uniform(key, shape, jnp.float32, -bound, bound)


def init_params(key, in_ch=4, latent_dims=16, c_dim=4, hw=16):
  feat = CH2 * (hw // 4) * (hw // 4)
  ks = jax.random.split(key, 14)
  p = {}
  p['e_conv1_w'] = _uniform(ks[0], (CH1, in_ch, 3, 3), in_ch * 9)
  p['e_conv1_b'] = _uniform(ks[1], (CH1,), in_ch * 9)
  p['e_conv2_w'] = _uniform(ks[2], (CH2, CH1, 3, 3), CH1 * 9)
  p['e_conv2_b'] = _uniform(ks[3], (CH2,), CH1 * 9)
  p['e_fc_w_h'] = _uniform(ks[4], (feat, latent_dims), feat + c_dim)
  p['e_fc_w_c'] = _uniform(ks[5], (c_dim, latent_dims), feat + c_dim)
  p['e_fc_b'] = _uniform(ks[6], (latent_dims,), feat + c_dim)
  p['d_fc_w_z'] = _uniform(ks[7], (latent_dims, feat), latent_dims + c_dim)
  p['d_fc_w_c'] = _uniform(ks[8], (c_dim, feat), latent_dims + c_dim)
  p['d_fc_b'] = _uniform(ks[9], (feat,), latent_dims + c_dim)
  p['d_conv1_w'] = _uniform(ks[10], (CH1, CH2, 3, 3), CH2 * 9)
  p['d_conv1_b'] = _uniform(ks[11], (CH1,), CH2 * 9)
  p['d_conv2_w'] = _uniform(ks[12], (in_ch, CH1, 3, 3), CH1 * 9)
  p['d_conv2_b'] = _uniform(ks[13], (in_ch,), CH1 * 9)
  return p


# -------------------------- pure-JAX reference (validation) ---------------------------

def reference_forward(params, x, c):
  def conv(h, w, b, stride):
    y = jax.lax.conv_general_dilated(
        h, w, (stride, stride), ((1, 1), (1, 1)),
        dimension_numbers=('NCHW', 'OIHW', 'NCHW'), precision=_HIGHEST)
    return y + b[None, :, None, None]

  N, _, H, W = x.shape
  h = jax.nn.relu(conv(x, params['e_conv1_w'], params['e_conv1_b'], 2))
  h = jax.nn.relu(conv(h, params['e_conv2_w'], params['e_conv2_b'], 2))
  hf = h.reshape(N, -1)
  z = (jnp.dot(hf, params['e_fc_w_h'], precision=_HIGHEST)
       + jnp.dot(c, params['e_fc_w_c'], precision=_HIGHEST) + params['e_fc_b'])
  f = jax.nn.relu(jnp.dot(z, params['d_fc_w_z'], precision=_HIGHEST)
                  + jnp.dot(c, params['d_fc_w_c'], precision=_HIGHEST) + params['d_fc_b'])
  f = f.reshape(N, CH2, H // 4, W // 4)
  f = jnp.repeat(jnp.repeat(f, 2, axis=2), 2, axis=3)
  f = jax.nn.relu(conv(f, params['d_conv1_w'], params['d_conv1_b'], 1))
  f = jnp.repeat(jnp.repeat(f, 2, axis=2), 2, axis=3)
  return jax.nn.sigmoid(conv(f, params['d_conv2_w'], params['d_conv2_b'], 1))


# ---------------------------------------- main -----------------------------------------

if __name__ == "__main__":
  key = jax.random.PRNGKey(0)
  k_p, k_x, k_c = jax.random.split(key, 3)

  batch, in_ch, hw, c_dim, latent_dims = 2, 4, 16, 4, 16
  params = init_params(k_p, in_ch=in_ch, latent_dims=latent_dims, c_dim=c_dim, hw=hw)

  x = jax.random.normal(k_x, (batch, in_ch, hw, hw), jnp.float32)
  c = jax.random.normal(k_c, (batch, c_dim), jnp.float32)

  operands = prepare_operands(params, batch, in_ch, hw, hw, latent_dims, c_dim)
  out = cae_apply(operands, x, c)
  jax.block_until_ready(out)

  assert out.shape == (batch, in_ch, hw, hw), out.shape
  assert bool(jnp.all(jnp.isfinite(out)))

  # Reference is f32 HIGHEST; kernel intentionally uses single-pass (bf16-input) MXU dots
  # with f32 accumulation plus an approximate EUP reciprocal in the sigmoid, so compare
  # with a tolerance appropriate for that regime (outputs are post-sigmoid, in (0,1)).
  ref = reference_forward(params, x, c)
  err = float(jnp.max(jnp.abs(out - ref)))
  assert err < 5e-3, f"kernel/reference mismatch: {err}"

  print("KERNEL_OK")
</pallas_src>

<mosaic_0001>
module attributes {stable_mosaic.version = 11 : i64} {
  func.func @_cae_fused_kernel(%arg0: memref<16x128xf32, #tpu.memory_space<vmem>>, %arg1: memref<1x8xf32, #tpu.memory_space<vmem>>, %arg2: memref<108x16xf32, #tpu.memory_space<vmem>>, %arg3: memref<1544x128xf32, #tpu.memory_space<vmem>>, %arg4: memref<40x512xf32, #tpu.memory_space<vmem>>, %arg5: memref<521x32xf32, #tpu.memory_space<vmem>>, %arg6: memref<16x128xf32, #tpu.memory_space<vmem>>) attributes {dimension_semantics = [], scalar_prefetch = 0 : i64, scratch_operands = 0 : i64, tpu.core_type = #tpu.core_type<tc>} {
    %c0 = arith.constant 0 : index
    %c0_0 = arith.constant 0 : index
    %0 = vector.load %arg0[%c0, %c0_0] : memref<16x128xf32, #tpu.memory_space<vmem>>, vector<16x128xf32>
    %c0_1 = arith.constant 0 : index
    %c0_2 = arith.constant 0 : index
    %1 = vector.load %arg1[%c0_1, %c0_2] : memref<1x8xf32, #tpu.memory_space<vmem>>, vector<1x8xf32>
    %c0_3 = arith.constant 0 : index
    %c0_4 = arith.constant 0 : index
    %2 = vector.load %arg2[%c0_3, %c0_4] : memref<108x16xf32, #tpu.memory_space<vmem>>, vector<24x16xf32>
    %cst = arith.constant dense<0.000000e+00> : vector<24x128xf32>
    %3 = tpu.matmul %2, %0, %cst {dimension_numbers = #tpu.dot_dimension_numbers<[1], [0], [0], [1], [0, 0, 1, 1], [], []>} : vector<24x16xf32>, vector<16x128xf32>, vector<24x128xf32> -> vector<24x128xf32>
    %4 = vector.extract_strided_slice %3 {offsets = [0, 0], sizes = [8, 128], strides = [1, 1]} : vector<24x128xf32> to vector<8x128xf32>
    %c0_5 = arith.constant 0 : index
    %c0_6 = arith.constant 0 : index
    %5 = vector.load %arg3[%c0_5, %c0_6] : memref<1544x128xf32, #tpu.memory_space<vmem>>, vector<128x128xf32>
    %cst_7 = arith.constant dense<0.000000e+00> : vector<8x128xf32>
    %6 = tpu.matmul %4, %5, %cst_7 {dimension_numbers = #tpu.dot_dimension_numbers<[1], [0], [0], [1], [0, 0, 1, 1], [], []>} : vector<8x128xf32>, vector<128x128xf32>, vector<8x128xf32> -> vector<8x128xf32>
    %7 = vector.extract_strided_slice %3 {offsets = [8, 0], sizes = [8, 128], strides = [1, 1]} : vector<24x128xf32> to vector<8x128xf32>
    %c128 = arith.constant 128 : index
    %c0_8 = arith.constant 0 : index
    %8 = vector.load %arg3[%c128, %c0_8] : memref<1544x128xf32, #tpu.memory_space<vmem>>, vector<128x128xf32>
    %cst_9 = arith.constant dense<0.000000e+00> : vector<8x128xf32>
    %9 = tpu.matmul %7, %8, %cst_9 {dimension_numbers = #tpu.dot_dimension_numbers<[1], [0], [0], [1], [0, 0, 1, 1], [], []>} : vector<8x128xf32>, vector<128x128xf32>, vector<8x128xf32> -> vector<8x128xf32>
    %10 = arith.addf %6, %9 : vector<8x128xf32>
    %11 = vector.extract_strided_slice %3 {offsets = [16, 0], sizes = [8, 128], strides = [1, 1]} : vector<24x128xf32> to vector<8x128xf32>
    %c256 = arith.constant 256 : index
    %c0_10 = arith.constant 0 : index
    %12 = vector.load %arg3[%c256, %c0_10] : memref<1544x128xf32, #tpu.memory_space<vmem>>, vector<128x128xf32>
    %cst_11 = arith.constant dense<0.000000e+00> : vector<8x128xf32>
    %13 = tpu.matmul %11, %12, %cst_11 {dimension_numbers = #tpu.dot_dimension_numbers<[1], [0], [0], [1], [0, 0, 1, 1], [], []>} : vector<8x128xf32>, vector<128x128xf32>, vector<8x128xf32> -> vector<8x128xf32>
    %14 = arith.addf %10, %13 : vector<8x128xf32>
    %c1536 = arith.constant 1536 : index
    %c0_12 = arith.constant 0 : index
    %15 = vector.load %arg3[%c1536, %c0_12] : memref<1544x128xf32, #tpu.memory_space<vmem>>, vector<1x128xf32>
    %16 = vector.broadcast %15 : vector<1x128xf32> to vector<8x128xf32>
    %17 = arith.addf %14, %16 : vector<8x128xf32>
    %cst_13 = arith.constant 0.000000e+00 : f32
    %18 = vector.broadcast %cst_13 : f32 to vector<8x128xf32>
    %19 = arith.maximumf %17, %18 : vector<8x128xf32>
    %c24 = arith.constant 24 : index
    %c0_14 = arith.constant 0 : index
    %20 = vector.load %arg2[%c24, %c0_14] : memref<108x16xf32, #tpu.memory_space<vmem>>, vector<12x8xf32>
    %cst_15 = arith.constant dense<0.000000e+00> : vector<12x128xf32>
    %21 = tpu.matmul %20, %19, %cst_15 {dimension_numbers = #tpu.dot_dimension_numbers<[1], [0], [0], [1], [0, 0, 1, 1], [], []>} : vector<12x8xf32>, vector<8x128xf32>, vector<12x128xf32> -> vector<12x128xf32>
    %22 = vector.extract_strided_slice %21 {offsets = [0, 0], sizes = [4, 128], strides = [1, 1]} : vector<12x128xf32> to vector<4x128xf32>
    %c384 = arith.constant 384 : index
    %c0_16 = arith.constant 0 : index
    %23 = vector.load %arg3[%c384, %c0_16] : memref<1544x128xf32, #tpu.memory_space<vmem>>, vector<128x128xf32>
    %cst_17 = arith.constant dense<0.000000e+00> : vector<4x128xf32>
    %24 = tpu.matmul %22, %23, %cst_17 {dimension_numbers = #tpu.dot_dimension_numbers<[1], [0], [0], [1], [0, 0, 1, 1], [], []>} : vector<4x128xf32>, vector<128x128xf32>, vector<4x128xf32> -> vector<4x128xf32>
    %25 = vector.extract_strided_slice %21 {offsets = [4, 0], sizes = [4, 128], strides = [1, 1]} : vector<12x128xf32> to vector<4x128xf32>
    %c512 = arith.constant 512 : index
    %c0_18 = arith.constant 0 : index
    %26 = vector.load %arg3[%c512, %c0_18] : memref<1544x128xf32, #tpu.memory_space<vmem>>, vector<128x128xf32>
    %cst_19 = arith.constant dense<0.000000e+00> : vector<4x128xf32>
    %27 = tpu.matmul %25, %26, %cst_19 {dimension_numbers = #tpu.dot_dimension_numbers<[1], [0], [0], [1], [0, 0, 1, 1], [], []>} : vector<4x128xf32>, vector<128x128xf32>, vector<4x128xf32> -> vector<4x128xf32>
    %28 = arith.addf %24, %27 : vector<4x128xf32>
    %29 = vector.extract_strided_slice %21 {offsets = [8, 0], sizes = [4, 128], strides = [1, 1]} : vector<12x128xf32> to vector<4x128xf32>
    %c640 = arith.constant 640 : index
    %c0_20 = arith.constant 0 : index
    %30 = vector.load %arg3[%c640, %c0_20] : memref<1544x128xf32, #tpu.memory_space<vmem>>, vector<128x128xf32>
    %cst_21 = arith.constant dense<0.000000e+00> : vector<4x128xf32>
    %31 = tpu.matmul %29, %30, %cst_21 {dimension_numbers = #tpu.dot_dimension_numbers<[1], [0], [0], [1], [0, 0, 1, 1], [], []>} : vector<4x128xf32>, vector<128x128xf32>, vector<4x128xf32> -> vector<4x128xf32>
    %32 = arith.addf %28, %31 : vector<4x128xf32>
    %c1537 = arith.constant 1537 : index
    %c0_22 = arith.constant 0 : index
    %33 = vector.load %arg3[%c1537, %c0_22] : memref<1544x128xf32, #tpu.memory_space<vmem>>, vector<1x128xf32>
    %34 = vector.broadcast %33 : vector<1x128xf32> to vector<4x128xf32>
    %35 = arith.addf %32, %34 : vector<4x128xf32>
    %cst_23 = arith.constant 0.000000e+00 : f32
    %36 = vector.broadcast %cst_23 : f32 to vector<4x128xf32>
    %37 = arith.maximumf %35, %36 : vector<4x128xf32>
    %38 = vector.extract_strided_slice %37 {offsets = [0, 0], sizes = [1, 128], strides = [1, 1]} : vector<4x128xf32> to vector<1x128xf32>
    %39 = vector.extract_strided_slice %37 {offsets = [1, 0], sizes = [1, 128], strides = [1, 1]} : vector<4x128xf32> to vector<1x128xf32>
    %40 = vector.extract_strided_slice %37 {offsets = [2, 0], sizes = [1, 128], strides = [1, 1]} : vector<4x128xf32> to vector<1x128xf32>
    %41 = vector.extract_strided_slice %37 {offsets = [3, 0], sizes = [1, 128], strides = [1, 1]} : vector<4x128xf32> to vector<1x128xf32>
    %42 = tpu.concatenate %38, %39, %40, %41 in 1 : vector<1x128xf32>, vector<1x128xf32>, vector<1x128xf32>, vector<1x128xf32> -> vector<1x512xf32>
    %c0_24 = arith.constant 0 : index
    %c0_25 = arith.constant 0 : index
    %43 = vector.load %arg5[%c0_24, %c0_25] : memref<521x32xf32, #tpu.memory_space<vmem>>, vector<512x32xf32>
    %cst_26 = arith.constant dense<0.000000e+00> : vector<1x32xf32>
    %44 = tpu.matmul %42, %43, %cst_26 {dimension_numbers = #tpu.dot_dimension_numbers<[1], [0], [0], [1], [0, 0, 1, 1], [], []>} : vector<1x512xf32>, vector<512x32xf32>, vector<1x32xf32> -> vector<1x32xf32>
    %c512_27 = arith.constant 512 : index
    %c0_28 = arith.constant 0 : index
    %45 = vector.load %arg5[%c512_27, %c0_28] : memref<521x32xf32, #tpu.memory_space<vmem>>, vector<8x32xf32>
    %cst_29 = arith.constant dense<0.000000e+00> : vector<1x32xf32>
    %46 = tpu.matmul %1, %45, %cst_29 {dimension_numbers = #tpu.dot_dimension_numbers<[1], [0], [0], [1], [0, 0, 1, 1], [], []>} : vector<1x8xf32>, vector<8x32xf32>, vector<1x32xf32> -> vector<1x32xf32>
    %47 = arith.addf %44, %46 : vector<1x32xf32>
    %c520 = arith.constant 520 : index
    %c0_30 = arith.constant 0 : index
    %48 = vector.load %arg5[%c520, %c0_30] : memref<521x32xf32, #tpu.memory_space<vmem>>, vector<1x32xf32>
    %49 = arith.addf %47, %48 : vector<1x32xf32>
    %c0_31 = arith.constant 0 : index
    %c0_32 = arith.constant 0 : index
    %50 = vector.load %arg4[%c0_31, %c0_32] : memref<40x512xf32, #tpu.memory_space<vmem>>, vector<32x512xf32>
    %cst_33 = arith.constant dense<0.000000e+00> : vector<1x512xf32>
    %51 = tpu.matmul %49, %50, %cst_33 {dimension_numbers = #tpu.dot_dimension_numbers<[1], [0], [0], [1], [0, 0, 1, 1], [], []>} : vector<1x32xf32>, vector<32x512xf32>, vector<1x512xf32> -> vector<1x512xf32>
    %c32 = arith.constant 32 : index
    %c0_34 = arith.constant 0 : index
    %52 = vector.load %arg4[%c32, %c0_34] : memref<40x512xf32, #tpu.memory_space<vmem>>, vector<8x512xf32>
    %cst_35 = arith.constant dense<0.000000e+00> : vector<1x512xf32>
    %53 = tpu.matmul %1, %52, %cst_35 {dimension_numbers = #tpu.dot_dimension_numbers<[1], [0], [0], [1], [0, 0, 1, 1], [], []>} : vector<1x8xf32>, vector<8x512xf32>, vector<1x512xf32> -> vector<1x512xf32>
    %54 = arith.addf %51, %53 : vector<1x512xf32>
    %55 = tpu.iota {dimensions = array<i32: 0>} : vector<4x128xi32>
    %c1540 = arith.constant 1540 : index
    %c0_36 = arith.constant 0 : index
    %56 = vector.load %arg3[%c1540, %c0_36] : memref<1544x128xf32, #tpu.memory_space<vmem>>, vector<4x128xf32>
    %c0_i32 = arith.constant 0 : i32
    %57 = vector.broadcast %c0_i32 : i32 to vector<4x128xi32>
    %58 = arith.cmpi eq, %55, %57 : vector<4x128xi32>
    %59 = vector.extract_strided_slice %54 {offsets = [0, 0], sizes = [1, 128], strides = [1, 1]} : vector<1x512xf32> to vector<1x128xf32>
    %cst_37 = arith.constant 0.000000e+00 : f32
    %60 = vector.shape_cast %59 : vector<1x128xf32> to vector<1x128xf32>
    %61 = vector.broadcast %60 : vector<1x128xf32> to vector<4x128xf32>
    %62 = vector.broadcast %cst_37 : f32 to vector<4x128xf32>
    %63 = arith.select %58, %61, %62 : vector<4x128xi1>, vector<4x128xf32>
    %64 = arith.addf %56, %63 : vector<4x128xf32>
    %c1_i32 = arith.constant 1 : i32
    %65 = vector.broadcast %c1_i32 : i32 to vector<4x128xi32>
    %66 = arith.cmpi eq, %55, %65 : vector<4x128xi32>
    %67 = vector.extract_strided_slice %54 {offsets = [0, 128], sizes = [1, 128], strides = [1, 1]} : vector<1x512xf32> to vector<1x128xf32>
    %cst_38 = arith.constant 0.000000e+00 : f32
    %68 = vector.shape_cast %67 : vector<1x128xf32> to vector<1x128xf32>
    %69 = vector.broadcast %68 : vector<1x128xf32> to vector<4x128xf32>
    %70 = vector.broadcast %cst_38 : f32 to vector<4x128xf32>
    %71 = arith.select %66, %69, %70 : vector<4x128xi1>, vector<4x128xf32>
    %72 = arith.addf %64, %71 : vector<4x128xf32>
    %c2_i32 = arith.constant 2 : i32
    %73 = vector.broadcast %c2_i32 : i32 to vector<4x128xi32>
    %74 = arith.cmpi eq, %55, %73 : vector<4x128xi32>
    %75 = vector.extract_strided_slice %54 {offsets = [0, 256], sizes = [1, 128], strides = [1, 1]} : vector<1x512xf32> to vector<1x128xf32>
    %cst_39 = arith.constant 0.000000e+00 : f32
    %76 = vector.shape_cast %75 : vector<1x128xf32> to vector<1x128xf32>
    %77 = vector.broadcast %76 : vector<1x128xf32> to vector<4x128xf32>
    %78 = vector.broadcast %cst_39 : f32 to vector<4x128xf32>
    %79 = arith.select %74, %77, %78 : vector<4x128xi1>, vector<4x128xf32>
    %80 = arith.addf %72, %79 : vector<4x128xf32>
    %c3_i32 = arith.constant 3 : i32
    %81 = vector.broadcast %c3_i32 : i32 to vector<4x128xi32>
    %82 = arith.cmpi eq, %55, %81 : vector<4x128xi32>
    %83 = vector.extract_strided_slice %54 {offsets = [0, 384], sizes = [1, 128], strides = [1, 1]} : vector<1x512xf32> to vector<1x128xf32>
    %cst_40 = arith.constant 0.000000e+00 : f32
    %84 = vector.shape_cast %83 : vector<1x128xf32> to vector<1x128xf32>
    %85 = vector.broadcast %84 : vector<1x128xf32> to vector<4x128xf32>
    %86 = vector.broadcast %cst_40 : f32 to vector<4x128xf32>
    %87 = arith.select %82, %85, %86 : vector<4x128xi1>, vector<4x128xf32>
    %88 = arith.addf %80, %87 : vector<4x128xf32>
    %cst_41 = arith.constant 0.000000e+00 : f32
    %89 = vector.broadcast %cst_41 : f32 to vector<4x128xf32>
    %90 = arith.maximumf %88, %89 : vector<4x128xf32>
    %c36 = arith.constant 36 : index
    %c0_42 = arith.constant 0 : index
    %91 = vector.load %arg2[%c36, %c0_42] : memref<108x16xf32, #tpu.memory_space<vmem>>, vector<24x4xf32>
    %cst_43 = arith.constant dense<0.000000e+00> : vector<24x128xf32>
    %92 = tpu.matmul %91, %90, %cst_43 {dimension_numbers = #tpu.dot_dimension_numbers<[1], [0], [0], [1], [0, 0, 1, 1], [], []>} : vector<24x4xf32>, vector<4x128xf32>, vector<24x128xf32> -> vector<24x128xf32>
    %93 = vector.extract_strided_slice %92 {offsets = [0, 0], sizes = [8, 128], strides = [1, 1]} : vector<24x128xf32> to vector<8x128xf32>
    %c768 = arith.constant 768 : index
    %c0_44 = arith.constant 0 : index
    %94 = vector.load %arg3[%c768, %c0_44] : memref<1544x128xf32, #tpu.memory_space<vmem>>, vector<128x128xf32>
    %cst_45 = arith.constant dense<0.000000e+00> : vector<8x128xf32>
    %95 = tpu.matmul %93, %94, %cst_45 {dimension_numbers = #tpu.dot_dimension_numbers<[1], [0], [0], [1], [0, 0, 1, 1], [], []>} : vector<8x128xf32>, vector<128x128xf32>, vector<8x128xf32> -> vector<8x128xf32>
    %96 = vector.extract_strided_slice %92 {offsets = [8, 0], sizes = [8, 128], strides = [1, 1]} : vector<24x128xf32> to vector<8x128xf32>
    %c896 = arith.constant 896 : index
    %c0_46 = arith.constant 0 : index
    %97 = vector.load %arg3[%c896, %c0_46] : memref<1544x128xf32, #tpu.memory_space<vmem>>, vector<128x128xf32>
    %cst_47 = arith.constant dense<0.000000e+00> : vector<8x128xf32>
    %98 = tpu.matmul %96, %97, %cst_47 {dimension_numbers = #tpu.dot_dimension_numbers<[1], [0], [0], [1], [0, 0, 1, 1], [], []>} : vector<8x128xf32>, vector<128x128xf32>, vector<8x128xf32> -> vector<8x128xf32>
    %99 = arith.addf %95, %98 : vector<8x128xf32>
    %100 = vector.extract_strided_slice %92 {offsets = [16, 0], sizes = [8, 128], strides = [1, 1]} : vector<24x128xf32> to vector<8x128xf32>
    %c1024 = arith.constant 1024 : index
    %c0_48 = arith.constant 0 : index
    %101 = vector.load %arg3[%c1024, %c0_48] : memref<1544x128xf32, #tpu.memory_space<vmem>>, vector<128x128xf32>
    %cst_49 = arith.constant dense<0.000000e+00> : vector<8x128xf32>
    %102 = tpu.matmul %100, %101, %cst_49 {dimension_numbers = #tpu.dot_dimension_numbers<[1], [0], [0], [1], [0, 0, 1, 1], [], []>} : vector<8x128xf32>, vector<128x128xf32>, vector<8x128xf32> -> vector<8x128xf32>
    %103 = arith.addf %99, %102 : vector<8x128xf32>
    %c1538 = arith.constant 1538 : index
    %c0_50 = arith.constant 0 : index
    %104 = vector.load %arg3[%c1538, %c0_50] : memref<1544x128xf32, #tpu.memory_space<vmem>>, vector<1x128xf32>
    %105 = vector.broadcast %104 : vector<1x128xf32> to vector<8x128xf32>
    %106 = arith.addf %103, %105 : vector<8x128xf32>
    %cst_51 = arith.constant 0.000000e+00 : f32
    %107 = vector.broadcast %cst_51 : f32 to vector<8x128xf32>
    %108 = arith.maximumf %106, %107 : vector<8x128xf32>
    %c60 = arith.constant 60 : index
    %c0_52 = arith.constant 0 : index
    %109 = vector.load %arg2[%c60, %c0_52] : memref<108x16xf32, #tpu.memory_space<vmem>>, vector<48x8xf32>
    %cst_53 = arith.constant dense<0.000000e+00> : vector<48x128xf32>
    %110 = tpu.matmul %109, %108, %cst_53 {dimension_numbers = #tpu.dot_dimension_numbers<[1], [0], [0], [1], [0, 0, 1, 1], [], []>} : vector<48x8xf32>, vector<8x128xf32>, vector<48x128xf32> -> vector<48x128xf32>
    %111 = vector.extract_strided_slice %110 {offsets = [0, 0], sizes = [16, 128], strides = [1, 1]} : vector<48x128xf32> to vector<16x128xf32>
    %c1152 = arith.constant 1152 : index
    %c0_54 = arith.constant 0 : index
    %112 = vector.load %arg3[%c1152, %c0_54] : memref<1544x128xf32, #tpu.memory_space<vmem>>, vector<128x128xf32>
    %cst_55 = arith.constant dense<0.000000e+00> : vector<16x128xf32>
    %113 = tpu.matmul %111, %112, %cst_55 {dimension_numbers = #tpu.dot_dimension_numbers<[1], [0], [0], [1], [0, 0, 1, 1], [], []>} : vector<16x128xf32>, vector<128x128xf32>, vector<16x128xf32> -> vector<16x128xf32>
    %114 = vector.extract_strided_slice %110 {offsets = [16, 0], sizes = [16, 128], strides = [1, 1]} : vector<48x128xf32> to vector<16x128xf32>
    %c1280 = arith.constant 1280 : index
    %c0_56 = arith.constant 0 : index
    %115 = vector.load %arg3[%c1280, %c0_56] : memref<1544x128xf32, #tpu.memory_space<vmem>>, vector<128x128xf32>
    %cst_57 = arith.constant dense<0.000000e+00> : vector<16x128xf32>
    %116 = tpu.matmul %114, %115, %cst_57 {dimension_numbers = #tpu.dot_dimension_numbers<[1], [0], [0], [1], [0, 0, 1, 1], [], []>} : vector<16x128xf32>, vector<128x128xf32>, vector<16x128xf32> -> vector<16x128xf32>
    %117 = arith.addf %113, %116 : vector<16x128xf32>
    %118 = vector.extract_strided_slice %110 {offsets = [32, 0], sizes = [16, 128], strides = [1, 1]} : vector<48x128xf32> to vector<16x128xf32>
    %c1408 = arith.constant 1408 : index
    %c0_58 = arith.constant 0 : index
    %119 = vector.load %arg3[%c1408, %c0_58] : memref<1544x128xf32, #tpu.memory_space<vmem>>, vector<128x128xf32>
    %cst_59 = arith.constant dense<0.000000e+00> : vector<16x128xf32>
    %120 = tpu.matmul %118, %119, %cst_59 {dimension_numbers = #tpu.dot_dimension_numbers<[1], [0], [0], [1], [0, 0, 1, 1], [], []>} : vector<16x128xf32>, vector<128x128xf32>, vector<16x128xf32> -> vector<16x128xf32>
    %121 = arith.addf %117, %120 : vector<16x128xf32>
    %c1539 = arith.constant 1539 : index
    %c0_60 = arith.constant 0 : index
    %122 = vector.load %arg3[%c1539, %c0_60] : memref<1544x128xf32, #tpu.memory_space<vmem>>, vector<1x128xf32>
    %123 = vector.broadcast %122 : vector<1x128xf32> to vector<16x128xf32>
    %124 = arith.addf %121, %123 : vector<16x128xf32>
    %cst_61 = arith.constant 0.000000e+00 : f32
    %125 = vector.broadcast %cst_61 : f32 to vector<16x128xf32>
    %126 = arith.subf %125, %124 : vector<16x128xf32>
    %127 = math.exp %126 : vector<16x128xf32>
    %cst_62 = arith.constant 1.000000e+00 : f32
    %128 = vector.broadcast %cst_62 : f32 to vector<16x128xf32>
    %129 = arith.addf %128, %127 : vector<16x128xf32>
    %130 = tpu.reciprocal %129 {approx = true} : vector<16x128xf32> -> vector<16x128xf32>
    %c0_63 = arith.constant 0 : index
    %c0_64 = arith.constant 0 : index
    %131 = vector.load %arg6[%c0_63, %c0_64] : memref<16x128xf32, #tpu.memory_space<vmem>>, vector<16x128xf32>
    tpu.vector_store %arg6[%c0_63, %c0_64], %130 {strides = array<i32>} : memref<16x128xf32, #tpu.memory_space<vmem>>, vector<16x128xf32>,
    return
  }
}

</mosaic_0001>

<llo_original>
// kernel: cae_apply.1
$region0: #{cae_apply.1}
  #allocation0 [shape = 'u32[]', space=smem, size = 0x4, offset = 0x4, fixed_abs, tag = 'smem constant byte address 0x4 - core index']
  #allocation1 [shape = 'u32[144,128]{1,0:T(1,128)}', space=vmem, size = 0x12000, scoped, tag = 'internal scratch']
  %s0 = inlined_call_operand.vmem [shape: f32[16,128], index: 0, kind: input, shape index: {}]
  %s1 = inlined_call_operand.vmem [shape: f32[1,8], index: 1, kind: input, shape index: {}]
  %s2 = inlined_call_operand.vmem [shape: f32[108,16], index: 2, kind: input, shape index: {}]
  %s3 = inlined_call_operand.hbm [shape: f32[1544,128], index: 3, kind: input, shape index: {}]
  %s4 = inlined_call_operand.vmem [shape: f32[40,512], index: 4, kind: input, shape index: {}]
  %s5 = inlined_call_operand.vmem [shape: f32[521,32], index: 5, kind: input, shape index: {}]
  %s6 = inlined_call_operand.vmem [shape: f32[16,128], index: 6, kind: output, shape index: {}]
  %s7 = sld [smem:[#allocation0]]
  $region38: #{cae_apply.1} parent=0
    _
  %s9 = ssub.s32 1, %s7
  %s10 = scalar_select 0, %s9, %s7
  $region1: #{cae_apply.1} parent=0
    #allocation2 [shape = 'u8[790528]{0}', space=vmem, size = 0xc1000, scoped, tag = 'input window, operand 3, single buffered']
    #allocation3 [shape = 's32[1]{0}', space=sflag, size = 0x4, scoped, tag = 'scoped memory for cae_apply.1']
    %11 = vsyncpa [#allocation3], 0
    // Predicated region
    $region2: #{cae_apply.1} parent=1 // pred_check
      _
    $region3: #{cae_apply.1} parent=1 // pred_check_branch
      %13 = sbr.rel (0) target = $region5
    $region4: #{cae_apply.1} parent=1 // pred_region
      _
    $region5: #{cae_apply.1} parent=1 // pred_fallthru
      _
    // Predicated region
    $region6: #{cae_apply.1} parent=1 // pred_check
      _
    $region7: #{cae_apply.1} parent=1 // pred_check_branch
      %15 = sbr.rel (0) target = $region9
    $region8: #{cae_apply.1} parent=1 // pred_region
      _
    $region9: #{cae_apply.1} parent=1 // pred_fallthru
      _
    // Predicated region
    $region10: #{cae_apply.1} parent=1 // pred_check
      _
    $region11: #{cae_apply.1} parent=1 // pred_check_branch
      %17 = sbr.rel (0) target = $region13
    $region12: #{cae_apply.1} parent=1 // pred_region
      _
    $region13: #{cae_apply.1} parent=1 // pred_fallthru
      _
    // Predicated region
    $region14: #{cae_apply.1} parent=1 // pred_check
      _
    $region15: #{cae_apply.1} parent=1 // pred_check_branch
      %19 = sbr.rel (0) target = $region17
    $region16: #{cae_apply.1} parent=1 // pred_region
      %s21 = ssub.s32 24704, 24704
      %22 = vsyncadd [#allocation3], %s21
      %s23 = sshll.u32 [#allocation2], 4
      %s24 = int_to_ptr.vmem [resolvable:$true] %s23
      %29 = dma.hbm_to_vmem [thread:$0]  %s3, 24704, %s24, [#allocation3], 128, 128, 8
    $region17: #{cae_apply.1} parent=1 // pred_fallthru
      _
    // Predicated region
    $region18: #{cae_apply.1} parent=1 // pred_check
      _
    $region19: #{cae_apply.1} parent=1 // pred_check_branch
      %31 = sbr.rel (0) target = $region21
    $region20: #{cae_apply.1} parent=1 // pred_region
      _
    $region21: #{cae_apply.1} parent=1 // pred_fallthru
      _
    // Predicated region
    $region22: #{cae_apply.1} parent=1 // pred_check
      _
    $region23: #{cae_apply.1} parent=1 // pred_check_branch
      %33 = sbr.rel (0) target = $region25
    $region24: #{cae_apply.1} parent=1 // pred_region
      _
    $region25: #{cae_apply.1} parent=1 // pred_fallthru
      _
    // Predicated region
    $region26: #{cae_apply.1} parent=1 // pred_check
      _
    $region27: #{cae_apply.1} parent=1 // pred_check_branch
      %35 = sbr.rel (0) target = $region29
    $region28: #{cae_apply.1} parent=1 // pred_region
      %36 = dma.done [#allocation3], 24704
    $region29: #{cae_apply.1} parent=1 // pred_fallthru
      _
    %v37 = vld [vmem:[%s0] sm:$0xff]
    %v38 = vld [vmem:[%s0 + $0x8] sm:$0xff]
    %v39 = vld [vmem:[%s1] sm:$0x1]
    %v40 = vld [vmem:[%s2] sm:$0xff]
    %v41 = vld [vmem:[%s2 + $0x8] sm:$0xff]
    %v42 = vld [vmem:[%s2 + $0x10] sm:$0xff]
    %vm43 = vcmask 130048
    %v45 = vsel %vm43, %v40, 0
    %v48 = vsel %vm43, %v41, 0
    %v51 = vsel %vm43, %v42, 0
    %53 = vmatprep.subr.mxu0 0.0
    %54 = vmatpush1.msra.mxu0 %v37
    %55 = vmatprep.subr.mxu0 0.0
    %56 = vmatpush1.msra.mxu0 %v38
    %57 = vmatprep.subr.mxu0 0.0
    %58 = vmatpush1.msra.mxu0 0.0
    %59 = vmatprep.subr.mxu0 0.0
    %60 = vmatpush1.msra.mxu0 0.0
    %61 = vmatprep.subr.mxu0 0.0
    %62 = vmatpush1.msra.mxu0 0.0
    %63 = vmatprep.subr.mxu0 0.0
    %64 = vmatpush1.msra.mxu0 0.0
    %65 = vmatprep.subr.mxu0 0.0
    %66 = vmatpush1.msra.mxu0 0.0
    %67 = vmatprep.subr.mxu0 0.0
    %68 = vmatpush1.msra.mxu0 0.0
    %69 = vmatprep.subr.mxu0 0.0
    %70 = vmatpush1.msra.mxu0 0.0
    %71 = vmatprep.subr.mxu0 0.0
    %72 = vmatpush1.msra.mxu0 0.0
    %73 = vmatprep.subr.mxu0 0.0
    %74 = vmatpush1.msra.mxu0 0.0
    %75 = vmatprep.subr.mxu0 0.0
    %76 = vmatpush1.msra.mxu0 0.0
    %77 = vmatprep.subr.mxu0 0.0
    %78 = vmatpush1.msra.mxu0 0.0
    %79 = vmatprep.subr.mxu0 0.0
    %80 = vmatpush1.msra.mxu0 0.0
    %81 = vmatprep.subr.mxu0 0.0
    %82 = vmatpush1.msra.mxu0 0.0
    %83 = vmatprep.subr.mxu0 0.0
    %84 = vmatpush1.msra.mxu0 0.0
    %85 = vmatprep.subr.mxu0 0.0
    %86 = vmatpush1.msra.mxu0 0.0
    %87 = vmatprep.subr.mxu0 0.0
    %88 = vmatpush1.msra.mxu0 0.0
    %89 = vmatprep.subr.mxu0 0.0
    %90 = vmatpush1.msra.mxu0 0.0
    %91 = vmatprep.subr.mxu0 0.0
    %92 = vmatpush1.msra.mxu0 0.0
    %93 = vmatprep.subr.mxu0 0.0
    %94 = vmatpush1.msra.mxu0 0.0
    %95 = vmatprep.subr.mxu0 0.0
    %96 = vmatpush1.msra.mxu0 0.0
    %97 = vmatprep.subr.mxu0 0.0
    %98 = vmatpush1.msra.mxu0 0.0
    %99 = vmatprep.subr.mxu0 0.0
    %100 = vmatpush1.msra.mxu0 0.0
    %101 = vmatprep.subr.mxu0 0.0
    %102 = vmatpush1.msra.mxu0 0.0
    %103 = vmatprep.subr.mxu0 0.0
    %104 = vmatpush1.msra.mxu0 0.0
    %105 = vmatprep.subr.mxu0 0.0
    %106 = vmatpush1.msra.mxu0 0.0
    %107 = vmatprep.subr.mxu0 0.0
    %108 = vmatpush1.msra.mxu0 0.0
    %109 = vmatprep.subr.mxu0 0.0
    %110 = vmatpush1.msra.mxu0 0.0
    %111 = vmatprep.subr.mxu0 0.0
    %112 = vmatpush1.msra.mxu0 0.0
    %113 = vmatprep.subr.mxu0 0.0
    %114 = vmatpush1.msra.mxu0 0.0
    %115 = vmatprep.subr.mxu0 0.0
    %116 = vmatpush1.msra.mxu0 0.0
    %117 = vmatprep.mubr.f32.mxu0 0.0
    %118 = vmatmul.mubr.f32.gmra.mrb[0].mxu0 %v45
    %v119 = vpop.f32.mrb[0].mxu0
    %v120 = vadd.f32 0.0, %v119
    %v121 = vpop.f32.mrb[0].mxu0
    %122 = vmatprep.mubr.f32.mxu0 0.0
    %123 = vmatmul.mubr.f32.gmra.mrb[0].mxu0 %v48
    %v124 = vpop.f32.mrb[0].mxu0
    %v125 = vadd.f32 0.0, %v124
    %v126 = vpop.f32.mrb[0].mxu0
    %127 = vmatprep.mubr.f32.mxu0 0.0
    %128 = vmatmul.mubr.f32.gmra.mrb[0].mxu0 %v51
    %v129 = vpop.f32.mrb[0].mxu0
    %v130 = vadd.f32 0.0, %v129
    %v131 = vpop.f32.mrb[0].mxu0
    %132 = vdwg.mxu0
    %v133 = vld [vmem:[#allocation2] sm:$0xff]
    %v134 = vld [vmem:[#allocation2 + $0x8] sm:$0xff]
    %v135 = vld [vmem:[#allocation2 + $0x10] sm:$0xff]
    %v136 = vld [vmem:[#allocation2 + $0x18] sm:$0xff]
    %v137 = vld [vmem:[#allocation2 + $0x20] sm:$0xff]
    %v138 = vld [vmem:[#allocation2 + $0x28] sm:$0xff]
    %v139 = vld [vmem:[#allocation2 + $0x30] sm:$0xff]
    %v140 = vld [vmem:[#allocation2 + $0x38] sm:$0xff]
    %v141 = vld [vmem:[#allocation2 + $0x40] sm:$0xff]
    %v142 = vld [vmem:[#allocation2 + $0x48] sm:$0xff]
    %v143 = vld [vmem:[#allocation2 + $0x50] sm:$0xff]
    %v144 = vld [vmem:[#allocation2 + $0x58] sm:$0xff]
    %v145 = vld [vmem:[#allocation2 + $0x60] sm:$0xff]
    %v146 = vld [vmem:[#allocation2 + $0x68] sm:$0xff]
    %v147 = vld [vmem:[#allocation2 + $0x70] sm:$0xff]
    %v148 = vld [vmem:[#allocation2 + $0x78] sm:$0xff]
    %v149 = vld [vmem:[#allocation2 + $0x80] sm:$0xff]
    %v150 = vld [vmem:[#allocation2 + $0x88] sm:$0xff]
    %v151 = vld [vmem:[#allocation2 + $0x90] sm:$0xff]
    %v152 = vld [vmem:[#allocation2 + $0x98] sm:$0xff]
    %v153 = vld [vmem:[#allocation2 + $0xa0] sm:$0xff]
    %v154 = vld [vmem:[#allocation2 + $0xa8] sm:$0xff]
    %v155 = vld [vmem:[#allocation2 + $0xb0] sm:$0xff]
    %v156 = vld [vmem:[#allocation2 + $0xb8] sm:$0xff]
    %v157 = vld [vmem:[#allocation2 + $0xc0] sm:$0xff]
    %v158 = vld [vmem:[#allocation2 + $0xc8] sm:$0xff]
    %v159 = vld [vmem:[#allocation2 + $0xd0] sm:$0xff]
    %v160 = vld [vmem:[#allocation2 + $0xd8] sm:$0xff]
    %v161 = vld [vmem:[#allocation2 + $0xe0] sm:$0xff]
    %v162 = vld [vmem:[#allocation2 + $0xe8] sm:$0xff]
    %v163 = vld [vmem:[#allocation2 + $0xf0] sm:$0xff]
    %v164 = vld [vmem:[#allocation2 + $0xf8] sm:$0xff]
    %165 = vmatprep.subr.mxu0 0.0
    %166 = vmatpush1.msra.mxu0 %v149
    %167 = vmatprep.subr.mxu0 0.0
    %168 = vmatpush1.msra.mxu0 %v150
    %169 = vmatprep.subr.mxu0 0.0
    %170 = vmatpush1.msra.mxu0 %v151
    %171 = vmatprep.subr.mxu0 0.0
    %172 = vmatpush1.msra.mxu0 %v152
    %173 = vmatprep.subr.mxu0 0.0
    %174 = vmatpush1.msra.mxu0 %v153
    %175 = vmatprep.subr.mxu0 0.0
    %176 = vmatpush1.msra.mxu0 %v154
    %177 = vmatprep.subr.mxu0 0.0
    %178 = vmatpush1.msra.mxu0 %v155
    %179 = vmatprep.subr.mxu0 0.0
    %180 = vmatpush1.msra.mxu0 %v156
    %181 = vmatprep.subr.mxu0 0.0
    %182 = vmatpush1.msra.mxu0 %v157
    %183 = vmatprep.subr.mxu0 0.0
    %184 = vmatpush1.msra.mxu0 %v158
    %185 = vmatprep.subr.mxu0 0.0
    %186 = vmatpush1.msra.mxu0 %v159
    %187 = vmatprep.subr.mxu0 0.0
    %188 = vmatpush1.msra.mxu0 %v160
    %189 = vmatprep.subr.mxu0 0.0
    %190 = vmatpush1.msra.mxu0 %v161
    %191 = vmatprep.subr.mxu0 0.0
    %192 = vmatpush1.msra.mxu0 %v162
    %193 = vmatprep.subr.mxu0 0.0
    %194 = vmatpush1.msra.mxu0 %v163
    %195 = vmatprep.subr.mxu0 0.0
    %196 = vmatpush1.msra.mxu0 %v164
    %197 = vmatprep.subr.mxu0 0.0
    %198 = vmatpush1.msra.mxu0 0.0
    %199 = vmatprep.subr.mxu0 0.0
    %200 = vmatpush1.msra.mxu0 0.0
    %201 = vmatprep.subr.mxu0 0.0
    %202 = vmatpush1.msra.mxu0 0.0
    %203 = vmatprep.subr.mxu0 0.0
    %204 = vmatpush1.msra.mxu0 0.0
    %205 = vmatprep.subr.mxu0 0.0
    %206 = vmatpush1.msra.mxu0 0.0
    %207 = vmatprep.subr.mxu0 0.0
    %208 = vmatpush1.msra.mxu0 0.0
    %209 = vmatprep.subr.mxu0 0.0
    %210 = vmatpush1.msra.mxu0 0.0
    %211 = vmatprep.subr.mxu0 0.0
    %212 = vmatpush1.msra.mxu0 0.0
    %213 = vmatprep.subr.mxu0 0.0
    %214 = vmatpush1.msra.mxu0 0.0
    %215 = vmatprep.subr.mxu0 0.0
    %216 = vmatpush1.msra.mxu0 0.0
    %217 = vmatprep.subr.mxu0 0.0
    %218 = vmatpush1.msra.mxu0 0.0
    %219 = vmatprep.subr.mxu0 0.0
    %220 = vmatpush1.msra.mxu0 0.0
    %221 = vmatprep.subr.mxu0 0.0
    %222 = vmatpush1.msra.mxu0 0.0
    %223 = vmatprep.subr.mxu0 0.0
    %224 = vmatpush1.msra.mxu0 0.0
    %225 = vmatprep.subr.mxu0 0.0
    %226 = vmatpush1.msra.mxu0 0.0
    %227 = vmatprep.subr.mxu0 0.0
    %228 = vmatpush1.msra.mxu0 0.0
    %229 = vmatprep.mubr.f32.mxu0 0.0
    %230 = vmatmul.mubr.f32.gmra.mrb[0].mxu0 %v125
    %v231 = vpop.f32.mrb[0].mxu0
    %v232 = vadd.f32 0.0, %v231
    %v233 = vpop.f32.mrb[0].mxu0
    %234 = vdwg.mxu0
    %235 = vmatprep.subr.mxu0 0.0
    %236 = vmatpush1.msra.mxu0 %v133
    %237 = vmatprep.subr.mxu0 0.0
    %238 = vmatpush1.msra.mxu0 %v134
    %239 = vmatprep.subr.mxu0 0.0
    %240 = vmatpush1.msra.mxu0 %v135
    %241 = vmatprep.subr.mxu0 0.0
    %242 = vmatpush1.msra.mxu0 %v136
    %243 = vmatprep.subr.mxu0 0.0
    %244 = vmatpush1.msra.mxu0 %v137
    %245 = vmatprep.subr.mxu0 0.0
    %246 = vmatpush1.msra.mxu0 %v138
    %247 = vmatprep.subr.mxu0 0.0
    %248 = vmatpush1.msra.mxu0 %v139
    %249 = vmatprep.subr.mxu0 0.0
    %250 = vmatpush1.msra.mxu0 %v140
    %251 = vmatprep.subr.mxu0 0.0
    %252 = vmatpush1.msra.mxu0 %v141
    %253 = vmatprep.subr.mxu0 0.0
    %254 = vmatpush1.msra.mxu0 %v142
    %255 = vmatprep.subr.mxu0 0.0
    %256 = vmatpush1.msra.mxu0 %v143
    %257 = vmatprep.subr.mxu0 0.0
    %258 = vmatpush1.msra.mxu0 %v144
    %259 = vmatprep.subr.mxu0 0.0
    %260 = vmatpush1.msra.mxu0 %v145
    %261 = vmatprep.subr.mxu0 0.0
    %262 = vmatpush1.msra.mxu0 %v146
    %263 = vmatprep.subr.mxu0 0.0
    %264 = vmatpush1.msra.mxu0 %v147
    %265 = vmatprep.subr.mxu0 0.0
    %266 = vmatpush1.msra.mxu0 %v148
    %267 = vmatprep.subr.mxu0 0.0
    %268 = vmatpush1.msra.mxu0 0.0
    %269 = vmatprep.subr.mxu0 0.0
    %270 = vmatpush1.msra.mxu0 0.0
    %271 = vmatprep.subr.mxu0 0.0
    %272 = vmatpush1.msra.mxu0 0.0
    %273 = vmatprep.subr.mxu0 0.0
    %274 = vmatpush1.msra.mxu0 0.0
    %275 = vmatprep.subr.mxu0 0.0
    %276 = vmatpush1.msra.mxu0 0.0
    %277 = vmatprep.subr.mxu0 0.0
    %278 = vmatpush1.msra.mxu0 0.0
    %279 = vmatprep.subr.mxu0 0.0
    %280 = vmatpush1.msra.mxu0 0.0
    %281 = vmatprep.subr.mxu0 0.0
    %282 = vmatpush1.msra.mxu0 0.0
    %283 = vmatprep.subr.mxu0 0.0
    %284 = vmatpush1.msra.mxu0 0.0
    %285 = vmatprep.subr.mxu0 0.0
    %286 = vmatpush1.msra.mxu0 0.0
    %287 = vmatprep.subr.mxu0 0.0
    %288 = vmatpush1.msra.mxu0 0.0
    %289 = vmatprep.subr.mxu0 0.0
    %290 = vmatpush1.msra.mxu0 0.0
    %291 = vmatprep.subr.mxu0 0.0
    %292 = vmatpush1.msra.mxu0 0.0
    %293 = vmatprep.subr.mxu0 0.0
    %294 = vmatpush1.msra.mxu0 0.0
    %295 = vmatprep.subr.mxu0 0.0
    %296 = vmatpush1.msra.mxu0 0.0
    %297 = vmatprep.subr.mxu0 0.0
    %298 = vmatpush1.msra.mxu0 0.0
    %299 = vmatprep.mubr.f32.mxu0 0.0
    %300 = vmatmul.mubr.f32.gmra.mrb[0].mxu0 %v120
    %v301 = vpop.f32.mrb[0].mxu0
    %v302 = vadd.f32 %v232, %v301
    %v303 = vpop.f32.mrb[0].mxu0
    %304 = vdwg.mxu0
    %v305 = vld [vmem:[#allocation2 + $0x100] sm:$0xff]
    %v306 = vld [vmem:[#allocation2 + $0x108] sm:$0xff]
    %v307 = vld [vmem:[#allocation2 + $0x110] sm:$0xff]
    %v308 = vld [vmem:[#allocation2 + $0x118] sm:$0xff]
    %v309 = vld [vmem:[#allocation2 + $0x120] sm:$0xff]
    %v310 = vld [vmem:[#allocation2 + $0x128] sm:$0xff]
    %v311 = vld [vmem:[#allocation2 + $0x130] sm:$0xff]
    %v312 = vld [vmem:[#allocation2 + $0x138] sm:$0xff]
    %v313 = vld [vmem:[#allocation2 + $0x140] sm:$0xff]
    %v314 = vld [vmem:[#allocation2 + $0x148] sm:$0xff]
    %v315 = vld [vmem:[#allocation2 + $0x150] sm:$0xff]
    %v316 = vld [vmem:[#allocation2 + $0x158] sm:$0xff]
    %v317 = vld [vmem:[#allocation2 + $0x160] sm:$0xff]
    %v318 = vld [vmem:[#allocation2 + $0x168] sm:$0xff]
    %v319 = vld [vmem:[#allocation2 + $0x170] sm:$0xff]
    %v320 = vld [vmem:[#allocation2 + $0x178] sm:$0xff]
    %321 = vmatprep.subr.mxu0 0.0
    %322 = vmatpush1.msra.mxu0 %v305
    %323 = vmatprep.subr.mxu0 0.0
    %324 = vmatpush1.msra.mxu0 %v306
    %325 = vmatprep.subr.mxu0 0.0
    %326 = vmatpush1.msra.mxu0 %v307
    %327 = vmatprep.subr.mxu0 0.0
    %328 = vmatpush1.msra.mxu0 %v308
    %329 = vmatprep.subr.mxu0 0.0
    %330 = vmatpush1.msra.mxu0 %v309
    %331 = vmatprep.subr.mxu0 0.0
    %332 = vmatpush1.msra.mxu0 %v310
    %333 = vmatprep.subr.mxu0 0.0
    %334 = vmatpush1.msra.mxu0 %v311
    %335 = vmatprep.subr.mxu0 0.0
    %336 = vmatpush1.msra.mxu0 %v312
    %337 = vmatprep.subr.mxu0 0.0
    %338 = vmatpush1.msra.mxu0 %v313
    %339 = vmatprep.subr.mxu0 0.0
    %340 = vmatpush1.msra.mxu0 %v314
    %341 = vmatprep.subr.mxu0 0.0
    %342 = vmatpush1.msra.mxu0 %v315
    %343 = vmatprep.subr.mxu0 0.0
    %344 = vmatpush1.msra.mxu0 %v316
    %345 = vmatprep.subr.mxu0 0.0
    %346 = vmatpush1.msra.mxu0 %v317
    %347 = vmatprep.subr.mxu0 0.0
    %348 = vmatpush1.msra.mxu0 %v318
    %349 = vmatprep.subr.mxu0 0.0
    %350 = vmatpush1.msra.mxu0 %v319
    %351 = vmatprep.subr.mxu0 0.0
    %352 = vmatpush1.msra.mxu0 %v320
    %353 = vmatprep.subr.mxu0 0.0
    %354 = vmatpush1.msra.mxu0 0.0
    %355 = vmatprep.subr.mxu0 0.0
    %356 = vmatpush1.msra.mxu0 0.0
    %357 = vmatprep.subr.mxu0 0.0
    %358 = vmatpush1.msra.mxu0 0.0
    %359 = vmatprep.subr.mxu0 0.0
    %360 = vmatpush1.msra.mxu0 0.0
    %361 = vmatprep.subr.mxu0 0.0
    %362 = vmatpush1.msra.mxu0 0.0
    %363 = vmatprep.subr.mxu0 0.0
    %364 = vmatpush1.msra.mxu0 0.0
    %365 = vmatprep.subr.mxu0 0.0
    %366 = vmatpush1.msra.mxu0 0.0
    %367 = vmatprep.subr.mxu0 0.0
    %368 = vmatpush1.msra.mxu0 0.0
    %369 = vmatprep.subr.mxu0 0.0
    %370 = vmatpush1.msra.mxu0 0.0
    %371 = vmatprep.subr.mxu0 0.0
    %372 = vmatpush1.msra.mxu0 0.0
    %373 = vmatprep.subr.mxu0 0.0
    %374 = vmatpush1.msra.mxu0 0.0
    %375 = vmatprep.subr.mxu0 0.0
    %376 = vmatpush1.msra.mxu0 0.0
    %377 = vmatprep.subr.mxu0 0.0
    %378 = vmatpush1.msra.mxu0 0.0
    %379 = vmatprep.subr.mxu0 0.0
    %380 = vmatpush1.msra.mxu0 0.0
    %381 = vmatprep.subr.mxu0 0.0
    %382 = vmatpush1.msra.mxu0 0.0
    %383 = vmatprep.subr.mxu0 0.0
    %384 = vmatpush1.msra.mxu0 0.0
    %385 = vmatprep.mubr.f32.mxu0 0.0
    %386 = vmatmul.mubr.f32.gmra.mrb[0].mxu0 %v130
    %v387 = vpop.f32.mrb[0].mxu0
    %v388 = vadd.f32 0.0, %v387
    %v389 = vpop.f32.mrb[0].mxu0
    %390 = vdwg.mxu0
    %v391 = vadd.f32 %v302, %v388
    %v392 = vld [vmem:[#allocation2 + $0x600] sm:$0x1]
    %v393 = vlaneseq
    %v394 = vshrl.u32 %v393, 7
    %v395 = vsub.s32 0, %v394
    %v396 = vrot.slane %v392, %v395
    %v397 = vadd.f32 %v391, %v396
    %v398 = vmax.f32 %v397, 0.0
    %v399 = vld [vmem:[%s2 + $0x18] sm:$0xff]
    %v400 = vld [vmem:[%s2 + $0x20] sm:$0xf]
    %vm401 = vcmask 64512
    %v403 = vsel %vm401, %v399, 0
    %v406 = vsel %vm401, %v400, 0
    %408 = vmatprep.subr.mxu0 0.0
    %409 = vmatpush1.msra.mxu0 %v398
    %410 = vmatprep.subr.mxu0 0.0
    %411 = vmatpush1.msra.mxu0 0.0
    %412 = vmatprep.subr.mxu0 0.0
    %413 = vmatpush1.msra.mxu0 0.0
    %414 = vmatprep.subr.mxu0 0.0
    %415 = vmatpush1.msra.mxu0 0.0
    %416 = vmatprep.subr.mxu0 0.0
    %417 = vmatpush1.msra.mxu0 0.0
    %418 = vmatprep.subr.mxu0 0.0
    %419 = vmatpush1.msra.mxu0 0.0
    %420 = vmatprep.subr.mxu0 0.0
    %421 = vmatpush1.msra.mxu0 0.0
    %422 = vmatprep.subr.mxu0 0.0
    %423 = vmatpush1.msra.mxu0 0.0
    %424 = vmatprep.subr.mxu0 0.0
    %425 = vmatpush1.msra.mxu0 0.0
    %426 = vmatprep.subr.mxu0 0.0
    %427 = vmatpush1.msra.mxu0 0.0
    %428 = vmatprep.subr.mxu0 0.0
    %429 = vmatpush1.msra.mxu0 0.0
    %430 = vmatprep.subr.mxu0 0.0
    %431 = vmatpush1.msra.mxu0 0.0
    %432 = vmatprep.subr.mxu0 0.0
    %433 = vmatpush1.msra.mxu0 0.0
    %434 = vmatprep.subr.mxu0 0.0
    %435 = vmatpush1.msra.mxu0 0.0
    %436 = vmatprep.subr.mxu0 0.0
    %437 = vmatpush1.msra.mxu0 0.0
    %438 = vmatprep.subr.mxu0 0.0
    %439 = vmatpush1.msra.mxu0 0.0
    %440 = vmatprep.subr.mxu0 0.0
    %441 = vmatpush1.msra.mxu0 0.0
    %442 = vmatprep.subr.mxu0 0.0
    %443 = vmatpush1.msra.mxu0 0.0
    %444 = vmatprep.subr.mxu0 0.0
    %445 = vmatpush1.msra.mxu0 0.0
    %446 = vmatprep.subr.mxu0 0.0
    %447 = vmatpush1.msra.mxu0 0.0
    %448 = vmatprep.subr.mxu0 0.0
    %449 = vmatpush1.msra.mxu0 0.0
    %450 = vmatprep.subr.mxu0 0.0
    %451 = vmatpush1.msra.mxu0 0.0
    %452 = vmatprep.subr.mxu0 0.0
    %453 = vmatpush1.msra.mxu0 0.0
    %454 = vmatprep.subr.mxu0 0.0
    %455 = vmatpush1.msra.mxu0 0.0
    %456 = vmatprep.subr.mxu0 0.0
    %457 = vmatpush1.msra.mxu0 0.0
    %458 = vmatprep.subr.mxu0 0.0
    %459 = vmatpush1.msra.mxu0 0.0
    %460 = vmatprep.subr.mxu0 0.0
    %461 = vmatpush1.msra.mxu0 0.0
    %462 = vmatprep.subr.mxu0 0.0
    %463 = vmatpush1.msra.mxu0 0.0
    %464 = vmatprep.subr.mxu0 0.0
    %465 = vmatpush1.msra.mxu0 0.0
    %466 = vmatprep.subr.mxu0 0.0
    %467 = vmatpush1.msra.mxu0 0.0
    %468 = vmatprep.subr.mxu0 0.0
    %469 = vmatpush1.msra.mxu0 0.0
    %470 = vmatprep.subr.mxu0 0.0
    %471 = vmatpush1.msra.mxu0 0.0
    %472 = vmatprep.mubr.f32.mxu0 0.0
    %473 = vmatmul.mubr.f32.gmra.mrb[0].mxu0 %v403
    %v474 = vpop.f32.mrb[0].mxu0
    %v475 = vadd.f32 0.0, %v474
    %v476 = vpop.f32.mrb[0].mxu0
    %477 = vmatprep.mubr.f32.mxu0 0.0
    %478 = vmatmul.mubr.f32.gmra.mrb[0].mxu0 %v406
    %v479 = vpop.f32.mrb[0].mxu0
    %v480 = vadd.f32 0.0, %v479
    %v481 = vpop.f32.mrb[0].mxu0
    %482 = vdwg.mxu0
    %v483 = vld [vmem:[#allocation2 + $0x180] sm:$0xff]
    %v484 = vld [vmem:[#allocation2 + $0x188] sm:$0xff]
    %v485 = vld [vmem:[#allocation2 + $0x190] sm:$0xff]
    %v486 = vld [vmem:[#allocation2 + $0x198] sm:$0xff]
    %v487 = vld [vmem:[#allocation2 + $0x1a0] sm:$0xff]
    %v488 = vld [vmem:[#allocation2 + $0x1a8] sm:$0xff]
    %v489 = vld [vmem:[#allocation2 + $0x1b0] sm:$0xff]
    %v490 = vld [vmem:[#allocation2 + $0x1b8] sm:$0xff]
    %v491 = vld [vmem:[#allocation2 + $0x1c0] sm:$0xff]
    %v492 = vld [vmem:[#allocation2 + $0x1c8] sm:$0xff]
    %v493 = vld [vmem:[#allocation2 + $0x1d0] sm:$0xff]
    %v494 = vld [vmem:[#allocation2 + $0x1d8] sm:$0xff]
    %v495 = vld [vmem:[#allocation2 + $0x1e0] sm:$0xff]
    %v496 = vld [vmem:[#allocation2 + $0x1e8] sm:$0xff]
    %v497 = vld [vmem:[#allocation2 + $0x1f0] sm:$0xff]
    %v498 = vld [vmem:[#allocation2 + $0x1f8] sm:$0xff]
    %v499 = vld [vmem:[#allocation2 + $0x200] sm:$0xff]
    %v500 = vld [vmem:[#allocation2 + $0x208] sm:$0xff]
    %v501 = vld [vmem:[#allocation2 + $0x210] sm:$0xff]
    %v502 = vld [vmem:[#allocation2 + $0x218] sm:$0xff]
    %v503 = vld [vmem:[#allocation2 + $0x220] sm:$0xff]
    %v504 = vld [vmem:[#allocation2 + $0x228] sm:$0xff]
    %v505 = vld [vmem:[#allocation2 + $0x230] sm:$0xff]
    %v506 = vld [vmem:[#allocation2 + $0x238] sm:$0xff]
    %v507 = vld [vmem:[#allocation2 + $0x240] sm:$0xff]
    %v508 = vld [vmem:[#allocation2 + $0x248] sm:$0xff]
    %v509 = vld [vmem:[#allocation2 + $0x250] sm:$0xff]
    %v510 = vld [vmem:[#allocation2 + $0x258] sm:$0xff]
    %v511 = vld [vmem:[#allocation2 + $0x260] sm:$0xff]
    %v512 = vld [vmem:[#allocation2 + $0x268] sm:$0xff]
    %v513 = vld [vmem:[#allocation2 + $0x270] sm:$0xff]
    %v514 = vld [vmem:[#allocation2 + $0x278] sm:$0xff]
    %v516 = vrot.slane %v475, 4
    %518 = vmatprep.subr.mxu0 0.0
    %519 = vmatpush1.msra.mxu0 %v499
    %520 = vmatprep.subr.mxu0 0.0
    %521 = vmatpush1.msra.mxu0 %v500
    %522 = vmatprep.subr.mxu0 0.0
    %523 = vmatpush1.msra.mxu0 %v501
    %524 = vmatprep.subr.mxu0 0.0
    %525 = vmatpush1.msra.mxu0 %v502
    %526 = vmatprep.subr.mxu0 0.0
    %527 = vmatpush1.msra.mxu0 %v503
    %528 = vmatprep.subr.mxu0 0.0
    %529 = vmatpush1.msra.mxu0 %v504
    %530 = vmatprep.subr.mxu0 0.0
    %531 = vmatpush1.msra.mxu0 %v505
    %532 = vmatprep.subr.mxu0 0.0
    %533 = vmatpush1.msra.mxu0 %v506
    %534 = vmatprep.subr.mxu0 0.0
    %535 = vmatpush1.msra.mxu0 %v507
    %536 = vmatprep.subr.mxu0 0.0
    %537 = vmatpush1.msra.mxu0 %v508
    %538 = vmatprep.subr.mxu0 0.0
    %539 = vmatpush1.msra.mxu0 %v509
    %540 = vmatprep.subr.mxu0 0.0
    %541 = vmatpush1.msra.mxu0 %v510
    %542 = vmatprep.subr.mxu0 0.0
    %543 = vmatpush1.msra.mxu0 %v511
    %544 = vmatprep.subr.mxu0 0.0
    %545 = vmatpush1.msra.mxu0 %v512
    %546 = vmatprep.subr.mxu0 0.0
    %547 = vmatpush1.msra.mxu0 %v513
    %548 = vmatprep.subr.mxu0 0.0
    %549 = vmatpush1.msra.mxu0 %v514
    %550 = vmatprep.subr.mxu0 0.0
    %551 = vmatpush1.msra.mxu0 0.0
    %552 = vmatprep.subr.mxu0 0.0
    %553 = vmatpush1.msra.mxu0 0.0
    %554 = vmatprep.subr.mxu0 0.0
    %555 = vmatpush1.msra.mxu0 0.0
    %556 = vmatprep.subr.mxu0 0.0
    %557 = vmatpush1.msra.mxu0 0.0
    %558 = vmatprep.subr.mxu0 0.0
    %559 = vmatpush1.msra.mxu0 0.0
    %560 = vmatprep.subr.mxu0 0.0
    %561 = vmatpush1.msra.mxu0 0.0
    %562 = vmatprep.subr.mxu0 0.0
    %563 = vmatpush1.msra.mxu0 0.0
    %564 = vmatprep.subr.mxu0 0.0
    %565 = vmatpush1.msra.mxu0 0.0
    %566 = vmatprep.subr.mxu0 0.0
    %567 = vmatpush1.msra.mxu0 0.0
    %568 = vmatprep.subr.mxu0 0.0
    %569 = vmatpush1.msra.mxu0 0.0
    %570 = vmatprep.subr.mxu0 0.0
    %571 = vmatpush1.msra.mxu0 0.0
    %572 = vmatprep.subr.mxu0 0.0
    %573 = vmatpush1.msra.mxu0 0.0
    %574 = vmatprep.subr.mxu0 0.0
    %575 = vmatpush1.msra.mxu0 0.0
    %576 = vmatprep.subr.mxu0 0.0
    %577 = vmatpush1.msra.mxu0 0.0
    %578 = vmatprep.subr.mxu0 0.0
    %579 = vmatpush1.msra.mxu0 0.0
    %580 = vmatprep.subr.mxu0 0.0
    %581 = vmatpush1.msra.mxu0 0.0
    %582 = vmatprep.mubr.f32.mxu0 0.0
    %583 = vmatmul.mubr.f32.gmra.mrb[0].mxu0 %v516
    %v584 = vpop.f32.mrb[0].mxu0
    %v585 = vadd.f32 0.0, %v584
    %v586 = vpop.f32.mrb[0].mxu0
    %587 = vdwg.mxu0
    %588 = vmatprep.subr.mxu0 0.0
    %589 = vmatpush1.msra.mxu0 %v483
    %590 = vmatprep.subr.mxu0 0.0
    %591 = vmatpush1.msra.mxu0 %v484
    %592 = vmatprep.subr.mxu0 0.0
    %593 = vmatpush1.msra.mxu0 %v485
    %594 = vmatprep.subr.mxu0 0.0
    %595 = vmatpush1.msra.mxu0 %v486
    %596 = vmatprep.subr.mxu0 0.0
    %597 = vmatpush1.msra.mxu0 %v487
    %598 = vmatprep.subr.mxu0 0.0
    %599 = vmatpush1.msra.mxu0 %v488
    %600 = vmatprep.subr.mxu0 0.0
    %601 = vmatpush1.msra.mxu0 %v489
    %602 = vmatprep.subr.mxu0 0.0
    %603 = vmatpush1.msra.mxu0 %v490
    %604 = vmatprep.subr.mxu0 0.0
    %605 = vmatpush1.msra.mxu0 %v491
    %606 = vmatprep.subr.mxu0 0.0
    %607 = vmatpush1.msra.mxu0 %v492
    %608 = vmatprep.subr.mxu0 0.0
    %609 = vmatpush1.msra.mxu0 %v493
    %610 = vmatprep.subr.mxu0 0.0
    %611 = vmatpush1.msra.mxu0 %v494
    %612 = vmatprep.subr.mxu0 0.0
    %613 = vmatpush1.msra.mxu0 %v495
    %614 = vmatprep.subr.mxu0 0.0
    %615 = vmatpush1.msra.mxu0 %v496
    %616 = vmatprep.subr.mxu0 0.0
    %617 = vmatpush1.msra.mxu0 %v497
    %618 = vmatprep.subr.mxu0 0.0
    %619 = vmatpush1.msra.mxu0 %v498
    %620 = vmatprep.subr.mxu0 0.0
    %621 = vmatpush1.msra.mxu0 0.0
    %622 = vmatprep.subr.mxu0 0.0
    %623 = vmatpush1.msra.mxu0 0.0
    %624 = vmatprep.subr.mxu0 0.0
    %625 = vmatpush1.msra.mxu0 0.0
    %626 = vmatprep.subr.mxu0 0.0
    %627 = vmatpush1.msra.mxu0 0.0
    %628 = vmatprep.subr.mxu0 0.0
    %629 = vmatpush1.msra.mxu0 0.0
    %630 = vmatprep.subr.mxu0 0.0
    %631 = vmatpush1.msra.mxu0 0.0
    %632 = vmatprep.subr.mxu0 0.0
    %633 = vmatpush1.msra.mxu0 0.0
    %634 = vmatprep.subr.mxu0 0.0
    %635 = vmatpush1.msra.mxu0 0.0
    %636 = vmatprep.subr.mxu0 0.0
    %637 = vmatpush1.msra.mxu0 0.0
    %638 = vmatprep.subr.mxu0 0.0
    %639 = vmatpush1.msra.mxu0 0.0
    %640 = vmatprep.subr.mxu0 0.0
    %641 = vmatpush1.msra.mxu0 0.0
    %642 = vmatprep.subr.mxu0 0.0
    %643 = vmatpush1.msra.mxu0 0.0
    %644 = vmatprep.subr.mxu0 0.0
    %645 = vmatpush1.msra.mxu0 0.0
    %646 = vmatprep.subr.mxu0 0.0
    %647 = vmatpush1.msra.mxu0 0.0
    %648 = vmatprep.subr.mxu0 0.0
    %649 = vmatpush1.msra.mxu0 0.0
    %650 = vmatprep.subr.mxu0 0.0
    %651 = vmatpush1.msra.mxu0 0.0
    %652 = vmatprep.mubr.f32.mxu0 0.0
    %653 = vmatmul.mubr.f32.gmra.mrb[0].mxu0 %v475
    %v654 = vpop.f32.mrb[0].mxu0
    %v655 = vadd.f32 %v585, %v654
    %v656 = vpop.f32.mrb[0].mxu0
    %657 = vdwg.mxu0
    %v658 = vld [vmem:[#allocation2 + $0x280] sm:$0xff]
    %v659 = vld [vmem:[#allocation2 + $0x288] sm:$0xff]
    %v660 = vld [vmem:[#allocation2 + $0x290] sm:$0xff]
    %v661 = vld [vmem:[#allocation2 + $0x298] sm:$0xff]
    %v662 = vld [vmem:[#allocation2 + $0x2a0] sm:$0xff]
    %v663 = vld [vmem:[#allocation2 + $0x2a8] sm:$0xff]
    %v664 = vld [vmem:[#allocation2 + $0x2b0] sm:$0xff]
    %v665 = vld [vmem:[#allocation2 + $0x2b8] sm:$0xff]
    %v666 = vld [vmem:[#allocation2 + $0x2c0] sm:$0xff]
    %v667 = vld [vmem:[#allocation2 + $0x2c8] sm:$0xff]
    %v668 = vld [vmem:[#allocation2 + $0x2d0] sm:$0xff]
    %v669 = vld [vmem:[#allocation2 + $0x2d8] sm:$0xff]
    %v670 = vld [vmem:[#allocation2 + $0x2e0] sm:$0xff]
    %v671 = vld [vmem:[#allocation2 + $0x2e8] sm:$0xff]
    %v672 = vld [vmem:[#allocation2 + $0x2f0] sm:$0xff]
    %v673 = vld [vmem:[#allocation2 + $0x2f8] sm:$0xff]
    %674 = vmatprep.subr.mxu0 0.0
    %675 = vmatpush1.msra.mxu0 %v658
    %676 = vmatprep.subr.mxu0 0.0
    %677 = vmatpush1.msra.mxu0 %v659
    %678 = vmatprep.subr.mxu0 0.0
    %679 = vmatpush1.msra.mxu0 %v660
    %680 = vmatprep.subr.mxu0 0.0
    %681 = vmatpush1.msra.mxu0 %v661
    %682 = vmatprep.subr.mxu0 0.0
    %683 = vmatpush1.msra.mxu0 %v662
    %684 = vmatprep.subr.mxu0 0.0
    %685 = vmatpush1.msra.mxu0 %v663
    %686 = vmatprep.subr.mxu0 0.0
    %687 = vmatpush1.msra.mxu0 %v664
    %688 = vmatprep.subr.mxu0 0.0
    %689 = vmatpush1.msra.mxu0 %v665
    %690 = vmatprep.subr.mxu0 0.0
    %691 = vmatpush1.msra.mxu0 %v666
    %692 = vmatprep.subr.mxu0 0.0
    %693 = vmatpush1.msra.mxu0 %v667
    %694 = vmatprep.subr.mxu0 0.0
    %695 = vmatpush1.msra.mxu0 %v668
    %696 = vmatprep.subr.mxu0 0.0
    %697 = vmatpush1.msra.mxu0 %v669
    %698 = vmatprep.subr.mxu0 0.0
    %699 = vmatpush1.msra.mxu0 %v670
    %700 = vmatprep.subr.mxu0 0.0
    %701 = vmatpush1.msra.mxu0 %v671
    %702 = vmatprep.subr.mxu0 0.0
    %703 = vmatpush1.msra.mxu0 %v672
    %704 = vmatprep.subr.mxu0 0.0
    %705 = vmatpush1.msra.mxu0 %v673
    %706 = vmatprep.subr.mxu0 0.0
    %707 = vmatpush1.msra.mxu0 0.0
    %708 = vmatprep.subr.mxu0 0.0
    %709 = vmatpush1.msra.mxu0 0.0
    %710 = vmatprep.subr.mxu0 0.0
    %711 = vmatpush1.msra.mxu0 0.0
    %712 = vmatprep.subr.mxu0 0.0
    %713 = vmatpush1.msra.mxu0 0.0
    %714 = vmatprep.subr.mxu0 0.0
    %715 = vmatpush1.msra.mxu0 0.0
    %716 = vmatprep.subr.mxu0 0.0
    %717 = vmatpush1.msra.mxu0 0.0
    %718 = vmatprep.subr.mxu0 0.0
    %719 = vmatpush1.msra.mxu0 0.0
    %720 = vmatprep.subr.mxu0 0.0
    %721 = vmatpush1.msra.mxu0 0.0
    %722 = vmatprep.subr.mxu0 0.0
    %723 = vmatpush1.msra.mxu0 0.0
    %724 = vmatprep.subr.mxu0 0.0
    %725 = vmatpush1.msra.mxu0 0.0
    %726 = vmatprep.subr.mxu0 0.0
    %727 = vmatpush1.msra.mxu0 0.0
    %728 = vmatprep.subr.mxu0 0.0
    %729 = vmatpush1.msra.mxu0 0.0
    %730 = vmatprep.subr.mxu0 0.0
    %731 = vmatpush1.msra.mxu0 0.0
    %732 = vmatprep.subr.mxu0 0.0
    %733 = vmatpush1.msra.mxu0 0.0
    %734 = vmatprep.subr.mxu0 0.0
    %735 = vmatpush1.msra.mxu0 0.0
    %736 = vmatprep.subr.mxu0 0.0
    %737 = vmatpush1.msra.mxu0 0.0
    %738 = vmatprep.mubr.f32.mxu0 0.0
    %739 = vmatmul.mubr.f32.gmra.mrb[0].mxu0 %v480
    %v740 = vpop.f32.mrb[0].mxu0
    %v741 = vadd.f32 0.0, %v740
    %v742 = vpop.f32.mrb[0].mxu0
    %743 = vdwg.mxu0
    %v744 = vadd.f32 %v655, %v741
    %v745 = vld [vmem:[#allocation2 + $0x601] sm:$0x1]
    %v746 = vlaneseq
    %v747 = vshrl.u32 %v746, 7
    %v748 = vsub.s32 0, %v747
    %v749 = vrot.slane %v745, %v748
    %v750 = vadd.f32 %v744, %v749
    %v751 = vmax.f32 %v750, 0.0
    %v753 = vrot.slane %v751, 1
    %v755 = vrot.slane %v751, 2
    %v757 = vrot.slane %v751, 3
    %v759 = vld [vmem:[%s5] sm:$0xff]
    %v760 = vld [vmem:[%s5 + $0x8] sm:$0xff]
    %v761 = vld [vmem:[%s5 + $0x10] sm:$0xff]
    %v762 = vld [vmem:[%s5 + $0x18] sm:$0xff]
    %v763 = vld [vmem:[%s5 + $0x20] sm:$0xff]
    %v764 = vld [vmem:[%s5 + $0x28] sm:$0xff]
    %v765 = vld [vmem:[%s5 + $0x30] sm:$0xff]
    %v766 = vld [vmem:[%s5 + $0x38] sm:$0xff]
    %v767 = vld [vmem:[%s5 + $0x40] sm:$0xff]
    %v768 = vld [vmem:[%s5 + $0x48] sm:$0xff]
    %v769 = vld [vmem:[%s5 + $0x50] sm:$0xff]
    %v770 = vld [vmem:[%s5 + $0x58] sm:$0xff]
    %v771 = vld [vmem:[%s5 + $0x60] sm:$0xff]
    %v772 = vld [vmem:[%s5 + $0x68] sm:$0xff]
    %v773 = vld [vmem:[%s5 + $0x70] sm:$0xff]
    %v774 = vld [vmem:[%s5 + $0x78] sm:$0xff]
    %v775 = vld [vmem:[%s5 + $0x80] sm:$0xff]
    %v776 = vld [vmem:[%s5 + $0x88] sm:$0xff]
    %v777 = vld [vmem:[%s5 + $0x90] sm:$0xff]
    %v778 = vld [vmem:[%s5 + $0x98] sm:$0xff]
    %v779 = vld [vmem:[%s5 + $0xa0] sm:$0xff]
    %v780 = vld [vmem:[%s5 + $0xa8] sm:$0xff]
    %v781 = vld [vmem:[%s5 + $0xb0] sm:$0xff]
    %v782 = vld [vmem:[%s5 + $0xb8] sm:$0xff]
    %v783 = vld [vmem:[%s5 + $0xc0] sm:$0xff]
    %v784 = vld [vmem:[%s5 + $0xc8] sm:$0xff]
    %v785 = vld [vmem:[%s5 + $0xd0] sm:$0xff]
    %v786 = vld [vmem:[%s5 + $0xd8] sm:$0xff]
    %v787 = vld [vmem:[%s5 + $0xe0] sm:$0xff]
    %v788 = vld [vmem:[%s5 + $0xe8] sm:$0xff]
    %v789 = vld [vmem:[%s5 + $0xf0] sm:$0xff]
    %v790 = vld [vmem:[%s5 + $0xf8] sm:$0xff]
    %v791 = vld [vmem:[%s5 + $0x100] sm:$0xff]
    %v792 = vld [vmem:[%s5 + $0x108] sm:$0xff]
    %v793 = vld [vmem:[%s5 + $0x110] sm:$0xff]
    %v794 = vld [vmem:[%s5 + $0x118] sm:$0xff]
    %v795 = vld [vmem:[%s5 + $0x120] sm:$0xff]
    %v796 = vld [vmem:[%s5 + $0x128] sm:$0xff]
    %v797 = vld [vmem:[%s5 + $0x130] sm:$0xff]
    %v798 = vld [vmem:[%s5 + $0x138] sm:$0xff]
    %v799 = vld [vmem:[%s5 + $0x140] sm:$0xff]
    %v800 = vld [vmem:[%s5 + $0x148] sm:$0xff]
    %v801 = vld [vmem:[%s5 + $0x150] sm:$0xff]
    %v802 = vld [vmem:[%s5 + $0x158] sm:$0xff]
    %v803 = vld [vmem:[%s5 + $0x160] sm:$0xff]
    %v804 = vld [vmem:[%s5 + $0x168] sm:$0xff]
    %v805 = vld [vmem:[%s5 + $0x170] sm:$0xff]
    %v806 = vld [vmem:[%s5 + $0x178] sm:$0xff]
    %v807 = vld [vmem:[%s5 + $0x180] sm:$0xff]
    %v808 = vld [vmem:[%s5 + $0x188] sm:$0xff]
    %v809 = vld [vmem:[%s5 + $0x190] sm:$0xff]
    %v810 = vld [vmem:[%s5 + $0x198] sm:$0xff]
    %v811 = vld [vmem:[%s5 + $0x1a0] sm:$0xff]
    %v812 = vld [vmem:[%s5 + $0x1a8] sm:$0xff]
    %v813 = vld [vmem:[%s5 + $0x1b0] sm:$0xff]
    %v814 = vld [vmem:[%s5 + $0x1b8] sm:$0xff]
    %v815 = vld [vmem:[%s5 + $0x1c0] sm:$0xff]
    %v816 = vld [vmem:[%s5 + $0x1c8] sm:$0xff]
    %v817 = vld [vmem:[%s5 + $0x1d0] sm:$0xff]
    %v818 = vld [vmem:[%s5 + $0x1d8] sm:$0xff]
    %v819 = vld [vmem:[%s5 + $0x1e0] sm:$0xff]
    %v820 = vld [vmem:[%s5 + $0x1e8] sm:$0xff]
    %v821 = vld [vmem:[%s5 + $0x1f0] sm:$0xff]
    %v822 = vld [vmem:[%s5 + $0x1f8] sm:$0xff]
    %v823 = vld [vmem:[%s5 + $0x200] sm:$0xff]
    %v825 = vsel %vm401, %v39, 0
    %827 = vmatprep.subr.mxu0 0.0
    %828 = vmatpush1.msra.mxu0 %v823
    %829 = vmatprep.subr.mxu0 0.0
    %830 = vmatpush1.msra.mxu0 0.0
    %831 = vmatprep.subr.mxu0 0.0
    %832 = vmatpush1.msra.mxu0 0.0
    %833 = vmatprep.subr.mxu0 0.0
    %834 = vmatpush1.msra.mxu0 0.0
    %835 = vmatprep.subr.mxu0 0.0
    %836 = vmatpush1.msra.mxu0 0.0
    %837 = vmatprep.subr.mxu0 0.0
    %838 = vmatpush1.msra.mxu0 0.0
    %839 = vmatprep.subr.mxu0 0.0
    %840 = vmatpush1.msra.mxu0 0.0
    %841 = vmatprep.subr.mxu0 0.0
    %842 = vmatpush1.msra.mxu0 0.0
    %843 = vmatprep.subr.mxu0 0.0
    %844 = vmatpush1.msra.mxu0 0.0
    %845 = vmatprep.subr.mxu0 0.0
    %846 = vmatpush1.msra.mxu0 0.0
    %847 = vmatprep.subr.mxu0 0.0
    %848 = vmatpush1.msra.mxu0 0.0
    %849 = vmatprep.subr.mxu0 0.0
    %850 = vmatpush1.msra.mxu0 0.0
    %851 = vmatprep.subr.mxu0 0.0
    %852 = vmatpush1.msra.mxu0 0.0
    %853 = vmatprep.subr.mxu0 0.0
    %854 = vmatpush1.msra.mxu0 0.0
    %855 = vmatprep.subr.mxu0 0.0
    %856 = vmatpush1.msra.mxu0 0.0
    %857 = vmatprep.subr.mxu0 0.0
    %858 = vmatpush1.msra.mxu0 0.0
    %859 = vmatprep.subr.mxu0 0.0
    %860 = vmatpush1.msra.mxu0 0.0
    %861 = vmatprep.subr.mxu0 0.0
    %862 = vmatpush1.msra.mxu0 0.0
    %863 = vmatprep.subr.mxu0 0.0
    %864 = vmatpush1.msra.mxu0 0.0
    %865 = vmatprep.subr.mxu0 0.0
    %866 = vmatpush1.msra.mxu0 0.0
    %867 = vmatprep.subr.mxu0 0.0
    %868 = vmatpush1.msra.mxu0 0.0
    %869 = vmatprep.subr.mxu0 0.0
    %870 = vmatpush1.msra.mxu0 0.0
    %871 = vmatprep.subr.mxu0 0.0
    %872 = vmatpush1.msra.mxu0 0.0
    %873 = vmatprep.subr.mxu0 0.0
    %874 = vmatpush1.msra.mxu0 0.0
    %875 = vmatprep.subr.mxu0 0.0
    %876 = vmatpush1.msra.mxu0 0.0
    %877 = vmatprep.subr.mxu0 0.0
    %878 = vmatpush1.msra.mxu0 0.0
    %879 = vmatprep.subr.mxu0 0.0
    %880 = vmatpush1.msra.mxu0 0.0
    %881 = vmatprep.subr.mxu0 0.0
    %882 = vmatpush1.msra.mxu0 0.0
    %883 = vmatprep.subr.mxu0 0.0
    %884 = vmatpush1.msra.mxu0 0.0
    %885 = vmatprep.subr.mxu0 0.0
    %886 = vmatpush1.msra.mxu0 0.0
    %887 = vmatprep.subr.mxu0 0.0
    %888 = vmatpush1.msra.mxu0 0.0
    %889 = vmatprep.subr.mxu0 0.0
    %890 = vmatpush1.msra.mxu0 0.0
    %891 = vmatprep.mubr.f32.mxu0 0.0
    %892 = vmatmul.mubr.f32.gmra.mrb[0].mxu0 %v825
    %v893 = vpop.f32.mrb[0].mxu0
    %v894 = vadd.f32 0.0, %v893
    %v895 = vpop.f32.mrb[0].mxu0
    %896 = vdwg.mxu0
    %897 = vmatprep.subr.mxu0 0.0
    %898 = vmatpush1.msra.mxu0 %v759
    %899 = vmatprep.subr.mxu0 0.0
    %900 = vmatpush1.msra.mxu0 %v760
    %901 = vmatprep.subr.mxu0 0.0
    %902 = vmatpush1.msra.mxu0 %v761
    %903 = vmatprep.subr.mxu0 0.0
    %904 = vmatpush1.msra.mxu0 %v762
    %905 = vmatprep.subr.mxu0 0.0
    %906 = vmatpush1.msra.mxu0 %v763
    %907 = vmatprep.subr.mxu0 0.0
    %908 = vmatpush1.msra.mxu0 %v764
    %909 = vmatprep.subr.mxu0 0.0
    %910 = vmatpush1.msra.mxu0 %v765
    %911 = vmatprep.subr.mxu0 0.0
    %912 = vmatpush1.msra.mxu0 %v766
    %913 = vmatprep.subr.mxu0 0.0
    %914 = vmatpush1.msra.mxu0 %v767
    %915 = vmatprep.subr.mxu0 0.0
    %916 = vmatpush1.msra.mxu0 %v768
    %917 = vmatprep.subr.mxu0 0.0
    %918 = vmatpush1.msra.mxu0 %v769
    %919 = vmatprep.subr.mxu0 0.0
    %920 = vmatpush1.msra.mxu0 %v770
    %921 = vmatprep.subr.mxu0 0.0
    %922 = vmatpush1.msra.mxu0 %v771
    %923 = vmatprep.subr.mxu0 0.0
    %924 = vmatpush1.msra.mxu0 %v772
    %925 = vmatprep.subr.mxu0 0.0
    %926 = vmatpush1.msra.mxu0 %v773
    %927 = vmatprep.subr.mxu0 0.0
    %928 = vmatpush1.msra.mxu0 %v774
    %929 = vmatprep.subr.mxu0 0.0
    %930 = vmatpush1.msra.mxu0 %v775
    %931 = vmatprep.subr.mxu0 0.0
    %932 = vmatpush1.msra.mxu0 %v776
    %933 = vmatprep.subr.mxu0 0.0
    %934 = vmatpush1.msra.mxu0 %v777
    %935 = vmatprep.subr.mxu0 0.0
    %936 = vmatpush1.msra.mxu0 %v778
    %937 = vmatprep.subr.mxu0 0.0
    %938 = vmatpush1.msra.mxu0 %v779
    %939 = vmatprep.subr.mxu0 0.0
    %940 = vmatpush1.msra.mxu0 %v780
    %941 = vmatprep.subr.mxu0 0.0
    %942 = vmatpush1.msra.mxu0 %v781
    %943 = vmatprep.subr.mxu0 0.0
    %944 = vmatpush1.msra.mxu0 %v782
    %945 = vmatprep.subr.mxu0 0.0
    %946 = vmatpush1.msra.mxu0 %v783
    %947 = vmatprep.subr.mxu0 0.0
    %948 = vmatpush1.msra.mxu0 %v784
    %949 = vmatprep.subr.mxu0 0.0
    %950 = vmatpush1.msra.mxu0 %v785
    %951 = vmatprep.subr.mxu0 0.0
    %952 = vmatpush1.msra.mxu0 %v786
    %953 = vmatprep.subr.mxu0 0.0
    %954 = vmatpush1.msra.mxu0 %v787
    %955 = vmatprep.subr.mxu0 0.0
    %956 = vmatpush1.msra.mxu0 %v788
    %957 = vmatprep.subr.mxu0 0.0
    %958 = vmatpush1.msra.mxu0 %v789
    %959 = vmatprep.subr.mxu0 0.0
    %960 = vmatpush1.msra.mxu0 %v790
    %961 = vmatprep.mubr.f32.mxu0 %v753
    %962 = vmatmul.mubr.f32.gmra.mrb[0].mxu0 %v751
    %v963 = vpop.f32.mrb[0].mxu0
    %v964 = vadd.f32 %v894, %v963
    %v965 = vpop.f32.mrb[0].mxu0
    %966 = vdwg.mxu0
    %967 = vmatprep.subr.mxu0 0.0
    %968 = vmatpush1.msra.mxu0 %v791
    %969 = vmatprep.subr.mxu0 0.0
    %970 = vmatpush1.msra.mxu0 %v792
    %971 = vmatprep.subr.mxu0 0.0
    %972 = vmatpush1.msra.mxu0 %v793
    %973 = vmatprep.subr.mxu0 0.0
    %974 = vmatpush1.msra.mxu0 %v794
    %975 = vmatprep.subr.mxu0 0.0
    %976 = vmatpush1.msra.mxu0 %v795
    %977 = vmatprep.subr.mxu0 0.0
    %978 = vmatpush1.msra.mxu0 %v796
    %979 = vmatprep.subr.mxu0 0.0
    %980 = vmatpush1.msra.mxu0 %v797
    %981 = vmatprep.subr.mxu0 0.0
    %982 = vmatpush1.msra.mxu0 %v798
    %983 = vmatprep.subr.mxu0 0.0
    %984 = vmatpush1.msra.mxu0 %v799
    %985 = vmatprep.subr.mxu0 0.0
    %986 = vmatpush1.msra.mxu0 %v800
    %987 = vmatprep.subr.mxu0 0.0
    %988 = vmatpush1.msra.mxu0 %v801
    %989 = vmatprep.subr.mxu0 0.0
    %990 = vmatpush1.msra.mxu0 %v802
    %991 = vmatprep.subr.mxu0 0.0
    %992 = vmatpush1.msra.mxu0 %v803
    %993 = vmatprep.subr.mxu0 0.0
    %994 = vmatpush1.msra.mxu0 %v804
    %995 = vmatprep.subr.mxu0 0.0
    %996 = vmatpush1.msra.mxu0 %v805
    %997 = vmatprep.subr.mxu0 0.0
    %998 = vmatpush1.msra.mxu0 %v806
    %999 = vmatprep.subr.mxu0 0.0
    %1000 = vmatpush1.msra.mxu0 %v807
    %1001 = vmatprep.subr.mxu0 0.0
    %1002 = vmatpush1.msra.mxu0 %v808
    %1003 = vmatprep.subr.mxu0 0.0
    %1004 = vmatpush1.msra.mxu0 %v809
    %1005 = vmatprep.subr.mxu0 0.0
    %1006 = vmatpush1.msra.mxu0 %v810
    %1007 = vmatprep.subr.mxu0 0.0
    %1008 = vmatpush1.msra.mxu0 %v811
    %1009 = vmatprep.subr.mxu0 0.0
    %1010 = vmatpush1.msra.mxu0 %v812
    %1011 = vmatprep.subr.mxu0 0.0
    %1012 = vmatpush1.msra.mxu0 %v813
    %1013 = vmatprep.subr.mxu0 0.0
    %1014 = vmatpush1.msra.mxu0 %v814
    %1015 = vmatprep.subr.mxu0 0.0
    %1016 = vmatpush1.msra.mxu0 %v815
    %1017 = vmatprep.subr.mxu0 0.0
    %1018 = vmatpush1.msra.mxu0 %v816
    %1019 = vmatprep.subr.mxu0 0.0
    %1020 = vmatpush1.msra.mxu0 %v817
    %1021 = vmatprep.subr.mxu0 0.0
    %1022 = vmatpush1.msra.mxu0 %v818
    %1023 = vmatprep.subr.mxu0 0.0
    %1024 = vmatpush1.msra.mxu0 %v819
    %1025 = vmatprep.subr.mxu0 0.0
    %1026 = vmatpush1.msra.mxu0 %v820
    %1027 = vmatprep.subr.mxu0 0.0
    %1028 = vmatpush1.msra.mxu0 %v821
    %1029 = vmatprep.subr.mxu0 0.0
    %1030 = vmatpush1.msra.mxu0 %v822
    %1031 = vmatprep.mubr.f32.mxu0 %v757
    %1032 = vmatmul.mubr.f32.gmra.mrb[0].mxu0 %v755
    %v1033 = vpop.f32.mrb[0].mxu0
    %v1034 = vadd.f32 %v964, %v1033
    %v1035 = vpop.f32.mrb[0].mxu0
    %1036 = vdwg.mxu0
    %v1037 = vld [vmem:[%s5 + $0x208] sm:$0x1]
    %v1038 = vadd.f32 %v1034, %v1037
    %v1039 = vld [vmem:[%s4] sm:$0xff]
    %v1040 = vld [vmem:[%s4 + $0x8] sm:$0xff]
    %v1041 = vld [vmem:[%s4 + $0x10] sm:$0xff]
    %v1042 = vld [vmem:[%s4 + $0x18] sm:$0xff]
    %v1043 = vld [vmem:[%s4 + $0x20] sm:$0xff]
    %v1044 = vld [vmem:[%s4 + $0x28] sm:$0xff]
    %v1045 = vld [vmem:[%s4 + $0x30] sm:$0xff]
    %v1046 = vld [vmem:[%s4 + $0x38] sm:$0xff]
    %v1047 = vld [vmem:[%s4 + $0x40] sm:$0xff]
    %v1048 = vld [vmem:[%s4 + $0x48] sm:$0xff]
    %v1049 = vld [vmem:[%s4 + $0x50] sm:$0xff]
    %v1050 = vld [vmem:[%s4 + $0x58] sm:$0xff]
    %v1051 = vld [vmem:[%s4 + $0x60] sm:$0xff]
    %v1052 = vld [vmem:[%s4 + $0x68] sm:$0xff]
    %v1053 = vld [vmem:[%s4 + $0x70] sm:$0xff]
    %v1054 = vld [vmem:[%s4 + $0x78] sm:$0xff]
    %v1055 = vld [vmem:[%s4 + $0x80] sm:$0xff]
    %v1056 = vld [vmem:[%s4 + $0x88] sm:$0xff]
    %v1057 = vld [vmem:[%s4 + $0x90] sm:$0xff]
    %v1058 = vld [vmem:[%s4 + $0x98] sm:$0xff]
    %1059 = vmatprep.subr.mxu0 %v1056
    %1060 = vmatpush1.msra.mxu0 %v1055
    %1061 = vmatprep.subr.mxu0 0.0
    %1062 = vmatpush1.msra.mxu0 0.0
    %1063 = vmatprep.subr.mxu0 0.0
    %1064 = vmatpush1.msra.mxu0 0.0
    %1065 = vmatprep.subr.mxu0 0.0
    %1066 = vmatpush1.msra.mxu0 0.0
    %1067 = vmatprep.subr.mxu0 0.0
    %1068 = vmatpush1.msra.mxu0 0.0
    %1069 = vmatprep.subr.mxu0 0.0
    %1070 = vmatpush1.msra.mxu0 0.0
    %1071 = vmatprep.subr.mxu0 0.0
    %1072 = vmatpush1.msra.mxu0 0.0
    %1073 = vmatprep.subr.mxu0 0.0
    %1074 = vmatpush1.msra.mxu0 0.0
    %1075 = vmatprep.subr.mxu0 0.0
    %1076 = vmatpush1.msra.mxu0 0.0
    %1077 = vmatprep.subr.mxu0 0.0
    %1078 = vmatpush1.msra.mxu0 0.0
    %1079 = vmatprep.subr.mxu0 0.0
    %1080 = vmatpush1.msra.mxu0 0.0
    %1081 = vmatprep.subr.mxu0 0.0
    %1082 = vmatpush1.msra.mxu0 0.0
    %1083 = vmatprep.subr.mxu0 0.0
    %1084 = vmatpush1.msra.mxu0 0.0
    %1085 = vmatprep.subr.mxu0 0.0
    %1086 = vmatpush1.msra.mxu0 0.0
    %1087 = vmatprep.subr.mxu0 0.0
    %1088 = vmatpush1.msra.mxu0 0.0
    %1089 = vmatprep.subr.mxu0 0.0
    %1090 = vmatpush1.msra.mxu0 0.0
    %1091 = vmatprep.subr.mxu0 0.0
    %1092 = vmatpush1.msra.mxu0 0.0
    %1093 = vmatprep.subr.mxu0 0.0
    %1094 = vmatpush1.msra.mxu0 0.0
    %1095 = vmatprep.subr.mxu0 0.0
    %1096 = vmatpush1.msra.mxu0 0.0
    %1097 = vmatprep.subr.mxu0 0.0
    %1098 = vmatpush1.msra.mxu0 0.0
    %1099 = vmatprep.subr.mxu0 0.0
    %1100 = vmatpush1.msra.mxu0 0.0
    %1101 = vmatprep.subr.mxu0 0.0
    %1102 = vmatpush1.msra.mxu0 0.0
    %1103 = vmatprep.subr.mxu0 0.0
    %1104 = vmatpush1.msra.mxu0 0.0
    %1105 = vmatprep.subr.mxu0 0.0
    %1106 = vmatpush1.msra.mxu0 0.0
    %1107 = vmatprep.subr.mxu0 0.0
    %1108 = vmatpush1.msra.mxu0 0.0
    %1109 = vmatprep.subr.mxu0 0.0
    %1110 = vmatpush1.msra.mxu0 0.0
    %1111 = vmatprep.subr.mxu0 0.0
    %1112 = vmatpush1.msra.mxu0 0.0
    %1113 = vmatprep.subr.mxu0 0.0
    %1114 = vmatpush1.msra.mxu0 0.0
    %1115 = vmatprep.subr.mxu0 0.0
    %1116 = vmatpush1.msra.mxu0 0.0
    %1117 = vmatprep.subr.mxu0 0.0
    %1118 = vmatpush1.msra.mxu0 0.0
    %1119 = vmatprep.subr.mxu0 0.0
    %1120 = vmatpush1.msra.mxu0 0.0
    %1121 = vmatprep.subr.mxu0 0.0
    %1122 = vmatpush1.msra.mxu0 0.0
    %1123 = vmatprep.mubr.f32.mxu0 0.0
    %1124 = vmatmul.mubr.f32.gmra.mrb[0].mxu0 %v825
    %v1125 = vpop.f32.mrb[0].mxu0
    %v1126 = vadd.f32 0.0, %v1125
    %v1127 = vpop.f32.mrb[0].mxu0
    %v1128 = vadd.f32 0.0, %v1127
    %1129 = vdwg.mxu0
    %1130 = vmatprep.subr.mxu0 %v1058
    %1131 = vmatpush1.msra.mxu0 %v1057
    %1132 = vmatprep.subr.mxu0 0.0
    %1133 = vmatpush1.msra.mxu0 0.0
    %1134 = vmatprep.subr.mxu0 0.0
    %1135 = vmatpush1.msra.mxu0 0.0
    %1136 = vmatprep.subr.mxu0 0.0
    %1137 = vmatpush1.msra.mxu0 0.0
    %1138 = vmatprep.subr.mxu0 0.0
    %1139 = vmatpush1.msra.mxu0 0.0
    %1140 = vmatprep.subr.mxu0 0.0
    %1141 = vmatpush1.msra.mxu0 0.0
    %1142 = vmatprep.subr.mxu0 0.0
    %1143 = vmatpush1.msra.mxu0 0.0
    %1144 = vmatprep.subr.mxu0 0.0
    %1145 = vmatpush1.msra.mxu0 0.0
    %1146 = vmatprep.subr.mxu0 0.0
    %1147 = vmatpush1.msra.mxu0 0.0
    %1148 = vmatprep.subr.mxu0 0.0
    %1149 = vmatpush1.msra.mxu0 0.0
    %1150 = vmatprep.subr.mxu0 0.0
    %1151 = vmatpush1.msra.mxu0 0.0
    %1152 = vmatprep.subr.mxu0 0.0
    %1153 = vmatpush1.msra.mxu0 0.0
    %1154 = vmatprep.subr.mxu0 0.0
    %1155 = vmatpush1.msra.mxu0 0.0
    %1156 = vmatprep.subr.mxu0 0.0
    %1157 = vmatpush1.msra.mxu0 0.0
    %1158 = vmatprep.subr.mxu0 0.0
    %1159 = vmatpush1.msra.mxu0 0.0
    %1160 = vmatprep.subr.mxu0 0.0
    %1161 = vmatpush1.msra.mxu0 0.0
    %1162 = vmatprep.subr.mxu0 0.0
    %1163 = vmatpush1.msra.mxu0 0.0
    %1164 = vmatprep.subr.mxu0 0.0
    %1165 = vmatpush1.msra.mxu0 0.0
    %1166 = vmatprep.subr.mxu0 0.0
    %1167 = vmatpush1.msra.mxu0 0.0
    %1168 = vmatprep.subr.mxu0 0.0
    %1169 = vmatpush1.msra.mxu0 0.0
    %1170 = vmatprep.subr.mxu0 0.0
    %1171 = vmatpush1.msra.mxu0 0.0
    %1172 = vmatprep.subr.mxu0 0.0
    %1173 = vmatpush1.msra.mxu0 0.0
    %1174 = vmatprep.subr.mxu0 0.0
    %1175 = vmatpush1.msra.mxu0 0.0
    %1176 = vmatprep.subr.mxu0 0.0
    %1177 = vmatpush1.msra.mxu0 0.0
    %1178 = vmatprep.subr.mxu0 0.0
    %1179 = vmatpush1.msra.mxu0 0.0
    %1180 = vmatprep.subr.mxu0 0.0
    %1181 = vmatpush1.msra.mxu0 0.0
    %1182 = vmatprep.subr.mxu0 0.0
    %1183 = vmatpush1.msra.mxu0 0.0
    %1184 = vmatprep.subr.mxu0 0.0
    %1185 = vmatpush1.msra.mxu0 0.0
    %1186 = vmatprep.subr.mxu0 0.0
    %1187 = vmatpush1.msra.mxu0 0.0
    %1188 = vmatprep.subr.mxu0 0.0
    %1189 = vmatpush1.msra.mxu0 0.0
    %1190 = vmatprep.subr.mxu0 0.0
    %1191 = vmatpush1.msra.mxu0 0.0
    %1192 = vmatprep.subr.mxu0 0.0
    %1193 = vmatpush1.msra.mxu0 0.0
    %1194 = vmatprep.mubr.f32.mxu0 0.0
    %1195 = vmatmul.mubr.f32.gmra.mrb[0].mxu0 %v825
    %v1196 = vpop.f32.mrb[0].mxu0
    %v1197 = vadd.f32 0.0, %v1196
    %v1198 = vpop.f32.mrb[0].mxu0
    %v1199 = vadd.f32 0.0, %v1198
    %1200 = vdwg.mxu0
    %vm1201 = vcmask 261120
    %v1203 = vsel %vm1201, %v1038, 0
    %1205 = vmatprep.subr.mxu0 %v1040
    %1206 = vmatpush1.msra.mxu0 %v1039
    %1207 = vmatprep.subr.mxu0 %v1044
    %1208 = vmatpush1.msra.mxu0 %v1043
    %1209 = vmatprep.subr.mxu0 %v1048
    %1210 = vmatpush1.msra.mxu0 %v1047
    %1211 = vmatprep.subr.mxu0 %v1052
    %1212 = vmatpush1.msra.mxu0 %v1051
    %1213 = vmatprep.subr.mxu0 0.0
    %1214 = vmatpush1.msra.mxu0 0.0
    %1215 = vmatprep.subr.mxu0 0.0
    %1216 = vmatpush1.msra.mxu0 0.0
    %1217 = vmatprep.subr.mxu0 0.0
    %1218 = vmatpush1.msra.mxu0 0.0
    %1219 = vmatprep.subr.mxu0 0.0
    %1220 = vmatpush1.msra.mxu0 0.0
    %1221 = vmatprep.subr.mxu0 0.0
    %1222 = vmatpush1.msra.mxu0 0.0
    %1223 = vmatprep.subr.mxu0 0.0
    %1224 = vmatpush1.msra.mxu0 0.0
    %1225 = vmatprep.subr.mxu0 0.0
    %1226 = vmatpush1.msra.mxu0 0.0
    %1227 = vmatprep.subr.mxu0 0.0
    %1228 = vmatpush1.msra.mxu0 0.0
    %1229 = vmatprep.subr.mxu0 0.0
    %1230 = vmatpush1.msra.mxu0 0.0
    %1231 = vmatprep.subr.mxu0 0.0
    %1232 = vmatpush1.msra.mxu0 0.0
    %1233 = vmatprep.subr.mxu0 0.0
    %1234 = vmatpush1.msra.mxu0 0.0
    %1235 = vmatprep.subr.mxu0 0.0
    %1236 = vmatpush1.msra.mxu0 0.0
    %1237 = vmatprep.subr.mxu0 0.0
    %1238 = vmatpush1.msra.mxu0 0.0
    %1239 = vmatprep.subr.mxu0 0.0
    %1240 = vmatpush1.msra.mxu0 0.0
    %1241 = vmatprep.subr.mxu0 0.0
    %1242 = vmatpush1.msra.mxu0 0.0
    %1243 = vmatprep.subr.mxu0 0.0
    %1244 = vmatpush1.msra.mxu0 0.0
    %1245 = vmatprep.subr.mxu0 0.0
    %1246 = vmatpush1.msra.mxu0 0.0
    %1247 = vmatprep.subr.mxu0 0.0
    %1248 = vmatpush1.msra.mxu0 0.0
    %1249 = vmatprep.subr.mxu0 0.0
    %1250 = vmatpush1.msra.mxu0 0.0
    %1251 = vmatprep.subr.mxu0 0.0
    %1252 = vmatpush1.msra.mxu0 0.0
    %1253 = vmatprep.subr.mxu0 0.0
    %1254 = vmatpush1.msra.mxu0 0.0
    %1255 = vmatprep.subr.mxu0 0.0
    %1256 = vmatpush1.msra.mxu0 0.0
    %1257 = vmatprep.subr.mxu0 0.0
    %1258 = vmatpush1.msra.mxu0 0.0
    %1259 = vmatprep.subr.mxu0 0.0
    %1260 = vmatpush1.msra.mxu0 0.0
    %1261 = vmatprep.subr.mxu0 0.0
    %1262 = vmatpush1.msra.mxu0 0.0
    %1263 = vmatprep.subr.mxu0 0.0
    %1264 = vmatpush1.msra.mxu0 0.0
    %1265 = vmatprep.subr.mxu0 0.0
    %1266 = vmatpush1.msra.mxu0 0.0
    %1267 = vmatprep.subr.mxu0 0.0
    %1268 = vmatpush1.msra.mxu0 0.0
    %1269 = vmatprep.mubr.f32.mxu0 0.0
    %1270 = vmatmul.mubr.f32.gmra.mrb[0].mxu0 %v1203
    %v1271 = vpop.f32.mrb[0].mxu0
    %v1272 = vadd.f32 %v1126, %v1271
    %v1273 = vpop.f32.mrb[0].mxu0
    %v1274 = vadd.f32 %v1128, %v1273
    %1275 = vdwg.mxu0
    %1276 = vmatprep.subr.mxu0 %v1042
    %1277 = vmatpush1.msra.mxu0 %v1041
    %1278 = vmatprep.subr.mxu0 %v1046
    %1279 = vmatpush1.msra.mxu0 %v1045
    %1280 = vmatprep.subr.mxu0 %v1050
    %1281 = vmatpush1.msra.mxu0 %v1049
    %1282 = vmatprep.subr.mxu0 %v1054
    %1283 = vmatpush1.msra.mxu0 %v1053
    %1284 = vmatprep.subr.mxu0 0.0
    %1285 = vmatpush1.msra.mxu0 0.0
    %1286 = vmatprep.subr.mxu0 0.0
    %1287 = vmatpush1.msra.mxu0 0.0
    %1288 = vmatprep.subr.mxu0 0.0
    %1289 = vmatpush1.msra.mxu0 0.0
    %1290 = vmatprep.subr.mxu0 0.0
    %1291 = vmatpush1.msra.mxu0 0.0
    %1292 = vmatprep.subr.mxu0 0.0
    %1293 = vmatpush1.msra.mxu0 0.0
    %1294 = vmatprep.subr.mxu0 0.0
    %1295 = vmatpush1.msra.mxu0 0.0
    %1296 = vmatprep.subr.mxu0 0.0
    %1297 = vmatpush1.msra.mxu0 0.0
    %1298 = vmatprep.subr.mxu0 0.0
    %1299 = vmatpush1.msra.mxu0 0.0
    %1300 = vmatprep.subr.mxu0 0.0
    %1301 = vmatpush1.msra.mxu0 0.0
    %1302 = vmatprep.subr.mxu0 0.0
    %1303 = vmatpush1.msra.mxu0 0.0
    %1304 = vmatprep.subr.mxu0 0.0
    %1305 = vmatpush1.msra.mxu0 0.0
    %1306 = vmatprep.subr.mxu0 0.0
    %1307 = vmatpush1.msra.mxu0 0.0
    %1308 = vmatprep.subr.mxu0 0.0
    %1309 = vmatpush1.msra.mxu0 0.0
    %1310 = vmatprep.subr.mxu0 0.0
    %1311 = vmatpush1.msra.mxu0 0.0
    %1312 = vmatprep.subr.mxu0 0.0
    %1313 = vmatpush1.msra.mxu0 0.0
    %1314 = vmatprep.subr.mxu0 0.0
    %1315 = vmatpush1.msra.mxu0 0.0
    %1316 = vmatprep.subr.mxu0 0.0
    %1317 = vmatpush1.msra.mxu0 0.0
    %1318 = vmatprep.subr.mxu0 0.0
    %1319 = vmatpush1.msra.mxu0 0.0
    %1320 = vmatprep.subr.mxu0 0.0
    %1321 = vmatpush1.msra.mxu0 0.0
    %1322 = vmatprep.subr.mxu0 0.0
    %1323 = vmatpush1.msra.mxu0 0.0
    %1324 = vmatprep.subr.mxu0 0.0
    %1325 = vmatpush1.msra.mxu0 0.0
    %1326 = vmatprep.subr.mxu0 0.0
    %1327 = vmatpush1.msra.mxu0 0.0
    %1328 = vmatprep.subr.mxu0 0.0
    %1329 = vmatpush1.msra.mxu0 0.0
    %1330 = vmatprep.subr.mxu0 0.0
    %1331 = vmatpush1.msra.mxu0 0.0
    %1332 = vmatprep.subr.mxu0 0.0
    %1333 = vmatpush1.msra.mxu0 0.0
    %1334 = vmatprep.subr.mxu0 0.0
    %1335 = vmatpush1.msra.mxu0 0.0
    %1336 = vmatprep.subr.mxu0 0.0
    %1337 = vmatpush1.msra.mxu0 0.0
    %1338 = vmatprep.subr.mxu0 0.0
    %1339 = vmatpush1.msra.mxu0 0.0
    %1340 = vmatprep.mubr.f32.mxu0 0.0
    %1341 = vmatmul.mubr.f32.gmra.mrb[0].mxu0 %v1203
    %v1342 = vpop.f32.mrb[0].mxu0
    %v1343 = vadd.f32 %v1197, %v1342
    %v1344 = vpop.f32.mrb[0].mxu0
    %v1345 = vadd.f32 %v1199, %v1344
    %1346 = vdwg.mxu0
    %v1347 = vlaneseq
    %v1348 = vshrl.u32 %v1347, 7
    %v1349 = vld [vmem:[#allocation2 + $0x604] sm:$0xf]
    %vm1350 = vcmp.eq.s32.totalorder %v1348, 0
    %v1351 = vlaneseq
    %v1352 = vshrl.u32 %v1351, 7
    %v1353 = vsub.s32 0, %v1352
    %v1354 = vrot.slane %v1272, %v1353
    %v1355 = vsel %vm1350, %v1354, 0.0
    %v1356 = vadd.f32 %v1349, %v1355
    %vm1357 = vcmp.eq.s32.totalorder %v1348, 1
    %v1358 = vlaneseq
    %v1359 = vshrl.u32 %v1358, 7
    %v1360 = vsub.s32 0, %v1359
    %v1361 = vrot.slane %v1274, %v1360
    %v1362 = vsel %vm1357, %v1361, 0.0
    %v1363 = vadd.f32 %v1356, %v1362
    %vm1364 = vcmp.eq.s32.totalorder %v1348, 2
    %v1365 = vlaneseq
    %v1366 = vshrl.u32 %v1365, 7
    %v1367 = vsub.s32 0, %v1366
    %v1368 = vrot.slane %v1343, %v1367
    %v1369 = vsel %vm1364, %v1368, 0.0
    %v1370 = vadd.f32 %v1363, %v1369
    %vm1371 = vcmp.eq.s32.totalorder %v1348, 3
    %v1372 = vlaneseq
    %v1373 = vshrl.u32 %v1372, 7
    %v1374 = vsub.s32 0, %v1373
    %v1375 = vrot.slane %v1345, %v1374
    %v1376 = vsel %vm1371, %v1375, 0.0
    %v1377 = vadd.f32 %v1370, %v1376
    %v1378 = vmax.f32 %v1377, 0.0
    %v1379 = vld [vmem:[%s2 + $0x24] sm:$0xff]
    %v1380 = vld [vmem:[%s2 + $0x2c] sm:$0xff]
    %v1381 = vld [vmem:[%s2 + $0x34] sm:$0xff]
    %vm1382 = vcmask 31744
    %v1384 = vsel %vm1382, %v1379, 0
    %v1387 = vsel %vm1382, %v1380, 0
    %v1390 = vsel %vm1382, %v1381, 0
    %vm1392 = vcmask 1043456
    %v1394 = vsel %vm1392, %v1378, 0
    %1396 = vmatprep.subr.mxu0 0.0
    %1397 = vmatpush1.msra.mxu0 %v1394
    %1398 = vmatprep.subr.mxu0 0.0
    %1399 = vmatpush1.msra.mxu0 0.0
    %1400 = vmatprep.subr.mxu0 0.0
    %1401 = vmatpush1.msra.mxu0 0.0
    %1402 = vmatprep.subr.mxu0 0.0
    %1403 = vmatpush1.msra.mxu0 0.0
    %1404 = vmatprep.subr.mxu0 0.0
    %1405 = vmatpush1.msra.mxu0 0.0
    %1406 = vmatprep.subr.mxu0 0.0
    %1407 = vmatpush1.msra.mxu0 0.0
    %1408 = vmatprep.subr.mxu0 0.0
    %1409 = vmatpush1.msra.mxu0 0.0
    %1410 = vmatprep.subr.mxu0 0.0
    %1411 = vmatpush1.msra.mxu0 0.0
    %1412 = vmatprep.subr.mxu0 0.0
    %1413 = vmatpush1.msra.mxu0 0.0
    %1414 = vmatprep.subr.mxu0 0.0
    %1415 = vmatpush1.msra.mxu0 0.0
    %1416 = vmatprep.subr.mxu0 0.0
    %1417 = vmatpush1.msra.mxu0 0.0
    %1418 = vmatprep.subr.mxu0 0.0
    %1419 = vmatpush1.msra.mxu0 0.0
    %1420 = vmatprep.subr.mxu0 0.0
    %1421 = vmatpush1.msra.mxu0 0.0
    %1422 = vmatprep.subr.mxu0 0.0
    %1423 = vmatpush1.msra.mxu0 0.0
    %1424 = vmatprep.subr.mxu0 0.0
    %1425 = vmatpush1.msra.mxu0 0.0
    %1426 = vmatprep.subr.mxu0 0.0
    %1427 = vmatpush1.msra.mxu0 0.0
    %1428 = vmatprep.subr.mxu0 0.0
    %1429 = vmatpush1.msra.mxu0 0.0
    %1430 = vmatprep.subr.mxu0 0.0
    %1431 = vmatpush1.msra.mxu0 0.0
    %1432 = vmatprep.subr.mxu0 0.0
    %1433 = vmatpush1.msra.mxu0 0.0
    %1434 = vmatprep.subr.mxu0 0.0
    %1435 = vmatpush1.msra.mxu0 0.0
    %1436 = vmatprep.subr.mxu0 0.0
    %1437 = vmatpush1.msra.mxu0 0.0
    %1438 = vmatprep.subr.mxu0 0.0
    %1439 = vmatpush1.msra.mxu0 0.0
    %1440 = vmatprep.subr.mxu0 0.0
    %1441 = vmatpush1.msra.mxu0 0.0
    %1442 = vmatprep.subr.mxu0 0.0
    %1443 = vmatpush1.msra.mxu0 0.0
    %1444 = vmatprep.subr.mxu0 0.0
    %1445 = vmatpush1.msra.mxu0 0.0
    %1446 = vmatprep.subr.mxu0 0.0
    %1447 = vmatpush1.msra.mxu0 0.0
    %1448 = vmatprep.subr.mxu0 0.0
    %1449 = vmatpush1.msra.mxu0 0.0
    %1450 = vmatprep.subr.mxu0 0.0
    %1451 = vmatpush1.msra.mxu0 0.0
    %1452 = vmatprep.subr.mxu0 0.0
    %1453 = vmatpush1.msra.mxu0 0.0
    %1454 = vmatprep.subr.mxu0 0.0
    %1455 = vmatpush1.msra.mxu0 0.0
    %1456 = vmatprep.subr.mxu0 0.0
    %1457 = vmatpush1.msra.mxu0 0.0
    %1458 = vmatprep.subr.mxu0 0.0
    %1459 = vmatpush1.msra.mxu0 0.0
    %1460 = vmatprep.mubr.f32.mxu0 0.0
    %1461 = vmatmul.mubr.f32.gmra.mrb[0].mxu0 %v1384
    %v1462 = vpop.f32.mrb[0].mxu0
    %v1463 = vadd.f32 0.0, %v1462
    %v1464 = vpop.f32.mrb[0].mxu0
    %1465 = vmatprep.mubr.f32.mxu0 0.0
    %1466 = vmatmul.mubr.f32.gmra.mrb[0].mxu0 %v1387
    %v1467 = vpop.f32.mrb[0].mxu0
    %v1468 = vadd.f32 0.0, %v1467
    %v1469 = vpop.f32.mrb[0].mxu0
    %1470 = vmatprep.mubr.f32.mxu0 0.0
    %1471 = vmatmul.mubr.f32.gmra.mrb[0].mxu0 %v1390
    %v1472 = vpop.f32.mrb[0].mxu0
    %v1473 = vadd.f32 0.0, %v1472
    %v1474 = vpop.f32.mrb[0].mxu0
    %1475 = vdwg.mxu0
    %v1476 = vld [vmem:[#allocation2 + $0x300] sm:$0xff]
    %v1477 = vld [vmem:[#allocation2 + $0x308] sm:$0xff]
    %v1478 = vld [vmem:[#allocation2 + $0x310] sm:$0xff]
    %v1479 = vld [vmem:[#allocation2 + $0x318] sm:$0xff]
    %v1480 = vld [vmem:[#allocation2 + $0x320] sm:$0xff]
    %v1481 = vld [vmem:[#allocation2 + $0x328] sm:$0xff]
    %v1482 = vld [vmem:[#allocation2 + $0x330] sm:$0xff]
    %v1483 = vld [vmem:[#allocation2 + $0x338] sm:$0xff]
    %v1484 = vld [vmem:[#allocation2 + $0x340] sm:$0xff]
    %v1485 = vld [vmem:[#allocation2 + $0x348] sm:$0xff]
    %v1486 = vld [vmem:[#allocation2 + $0x350] sm:$0xff]
    %v1487 = vld [vmem:[#allocation2 + $0x358] sm:$0xff]
    %v1488 = vld [vmem:[#allocation2 + $0x360] sm:$0xff]
    %v1489 = vld [vmem:[#allocation2 + $0x368] sm:$0xff]
    %v1490 = vld [vmem:[#allocation2 + $0x370] sm:$0xff]
    %v1491 = vld [vmem:[#allocation2 + $0x378] sm:$0xff]
    %v1492 = vld [vmem:[#allocation2 + $0x380] sm:$0xff]
    %v1493 = vld [vmem:[#allocation2 + $0x388] sm:$0xff]
    %v1494 = vld [vmem:[#allocation2 + $0x390] sm:$0xff]
    %v1495 = vld [vmem:[#allocation2 + $0x398] sm:$0xff]
    %v1496 = vld [vmem:[#allocation2 + $0x3a0] sm:$0xff]
    %v1497 = vld [vmem:[#allocation2 + $0x3a8] sm:$0xff]
    %v1498 = vld [vmem:[#allocation2 + $0x3b0] sm:$0xff]
    %v1499 = vld [vmem:[#allocation2 + $0x3b8] sm:$0xff]
    %v1500 = vld [vmem:[#allocation2 + $0x3c0] sm:$0xff]
    %v1501 = vld [vmem:[#allocation2 + $0x3c8] sm:$0xff]
    %v1502 = vld [vmem:[#allocation2 + $0x3d0] sm:$0xff]
    %v1503 = vld [vmem:[#allocation2 + $0x3d8] sm:$0xff]
    %v1504 = vld [vmem:[#allocation2 + $0x3e0] sm:$0xff]
    %v1505 = vld [vmem:[#allocation2 + $0x3e8] sm:$0xff]
    %v1506 = vld [vmem:[#allocation2 + $0x3f0] sm:$0xff]
    %v1507 = vld [vmem:[#allocation2 + $0x3f8] sm:$0xff]
    %1508 = vmatprep.subr.mxu0 0.0
    %1509 = vmatpush1.msra.mxu0 %v1492
    %1510 = vmatprep.subr.mxu0 0.0
    %1511 = vmatpush1.msra.mxu0 %v1493
    %1512 = vmatprep.subr.mxu0 0.0
    %1513 = vmatpush1.msra.mxu0 %v1494
    %1514 = vmatprep.subr.mxu0 0.0
    %1515 = vmatpush1.msra.mxu0 %v1495
    %1516 = vmatprep.subr.mxu0 0.0
    %1517 = vmatpush1.msra.mxu0 %v1496
    %1518 = vmatprep.subr.mxu0 0.0
    %1519 = vmatpush1.msra.mxu0 %v1497
    %1520 = vmatprep.subr.mxu0 0.0
    %1521 = vmatpush1.msra.mxu0 %v1498
    %1522 = vmatprep.subr.mxu0 0.0
    %1523 = vmatpush1.msra.mxu0 %v1499
    %1524 = vmatprep.subr.mxu0 0.0
    %1525 = vmatpush1.msra.mxu0 %v1500
    %1526 = vmatprep.subr.mxu0 0.0
    %1527 = vmatpush1.msra.mxu0 %v1501
    %1528 = vmatprep.subr.mxu0 0.0
    %1529 = vmatpush1.msra.mxu0 %v1502
    %1530 = vmatprep.subr.mxu0 0.0
    %1531 = vmatpush1.msra.mxu0 %v1503
    %1532 = vmatprep.subr.mxu0 0.0
    %1533 = vmatpush1.msra.mxu0 %v1504
    %1534 = vmatprep.subr.mxu0 0.0
    %1535 = vmatpush1.msra.mxu0 %v1505
    %1536 = vmatprep.subr.mxu0 0.0
    %1537 = vmatpush1.msra.mxu0 %v1506
    %1538 = vmatprep.subr.mxu0 0.0
    %1539 = vmatpush1.msra.mxu0 %v1507
    %1540 = vmatprep.subr.mxu0 0.0
    %1541 = vmatpush1.msra.mxu0 0.0
    %1542 = vmatprep.subr.mxu0 0.0
    %1543 = vmatpush1.msra.mxu0 0.0
    %1544 = vmatprep.subr.mxu0 0.0
    %1545 = vmatpush1.msra.mxu0 0.0
    %1546 = vmatprep.subr.mxu0 0.0
    %1547 = vmatpush1.msra.mxu0 0.0
    %1548 = vmatprep.subr.mxu0 0.0
    %1549 = vmatpush1.msra.mxu0 0.0
    %1550 = vmatprep.subr.mxu0 0.0
    %1551 = vmatpush1.msra.mxu0 0.0
    %1552 = vmatprep.subr.mxu0 0.0
    %1553 = vmatpush1.msra.mxu0 0.0
    %1554 = vmatprep.subr.mxu0 0.0
    %1555 = vmatpush1.msra.mxu0 0.0
    %1556 = vmatprep.subr.mxu0 0.0
    %1557 = vmatpush1.msra.mxu0 0.0
    %1558 = vmatprep.subr.mxu0 0.0
    %1559 = vmatpush1.msra.mxu0 0.0
    %1560 = vmatprep.subr.mxu0 0.0
    %1561 = vmatpush1.msra.mxu0 0.0
    %1562 = vmatprep.subr.mxu0 0.0
    %1563 = vmatpush1.msra.mxu0 0.0
    %1564 = vmatprep.subr.mxu0 0.0
    %1565 = vmatpush1.msra.mxu0 0.0
    %1566 = vmatprep.subr.mxu0 0.0
    %1567 = vmatpush1.msra.mxu0 0.0
    %1568 = vmatprep.subr.mxu0 0.0
    %1569 = vmatpush1.msra.mxu0 0.0
    %1570 = vmatprep.subr.mxu0 0.0
    %1571 = vmatpush1.msra.mxu0 0.0
    %1572 = vmatprep.mubr.f32.mxu0 0.0
    %1573 = vmatmul.mubr.f32.gmra.mrb[0].mxu0 %v1468
    %v1574 = vpop.f32.mrb[0].mxu0
    %v1575 = vadd.f32 0.0, %v1574
    %v1576 = vpop.f32.mrb[0].mxu0
    %1577 = vdwg.mxu0
    %1578 = vmatprep.subr.mxu0 0.0
    %1579 = vmatpush1.msra.mxu0 %v1476
    %1580 = vmatprep.subr.mxu0 0.0
    %1581 = vmatpush1.msra.mxu0 %v1477
    %1582 = vmatprep.subr.mxu0 0.0
    %1583 = vmatpush1.msra.mxu0 %v1478
    %1584 = vmatprep.subr.mxu0 0.0
    %1585 = vmatpush1.msra.mxu0 %v1479
    %1586 = vmatprep.subr.mxu0 0.0
    %1587 = vmatpush1.msra.mxu0 %v1480
    %1588 = vmatprep.subr.mxu0 0.0
    %1589 = vmatpush1.msra.mxu0 %v1481
    %1590 = vmatprep.subr.mxu0 0.0
    %1591 = vmatpush1.msra.mxu0 %v1482
    %1592 = vmatprep.subr.mxu0 0.0
    %1593 = vmatpush1.msra.mxu0 %v1483
    %1594 = vmatprep.subr.mxu0 0.0
    %1595 = vmatpush1.msra.mxu0 %v1484
    %1596 = vmatprep.subr.mxu0 0.0
    %1597 = vmatpush1.msra.mxu0 %v1485
    %1598 = vmatprep.subr.mxu0 0.0
    %1599 = vmatpush1.msra.mxu0 %v1486
    %1600 = vmatprep.subr.mxu0 0.0
    %1601 = vmatpush1.msra.mxu0 %v1487
    %1602 = vmatprep.subr.mxu0 0.0
    %1603 = vmatpush1.msra.mxu0 %v1488
    %1604 = vmatprep.subr.mxu0 0.0
    %1605 = vmatpush1.msra.mxu0 %v1489
    %1606 = vmatprep.subr.mxu0 0.0
    %1607 = vmatpush1.msra.mxu0 %v1490
    %1608 = vmatprep.subr.mxu0 0.0
    %1609 = vmatpush1.msra.mxu0 %v1491
    %1610 = vmatprep.subr.mxu0 0.0
    %1611 = vmatpush1.msra.mxu0 0.0
    %1612 = vmatprep.subr.mxu0 0.0
    %1613 = vmatpush1.msra.mxu0 0.0
    %1614 = vmatprep.subr.mxu0 0.0
    %1615 = vmatpush1.msra.mxu0 0.0
    %1616 = vmatprep.subr.mxu0 0.0
    %1617 = vmatpush1.msra.mxu0 0.0
    %1618 = vmatprep.subr.mxu0 0.0
    %1619 = vmatpush1.msra.mxu0 0.0
    %1620 = vmatprep.subr.mxu0 0.0
    %1621 = vmatpush1.msra.mxu0 0.0
    %1622 = vmatprep.subr.mxu0 0.0
    %1623 = vmatpush1.msra.mxu0 0.0
    %1624 = vmatprep.subr.mxu0 0.0
    %1625 = vmatpush1.msra.mxu0 0.0
    %1626 = vmatprep.subr.mxu0 0.0
    %1627 = vmatpush1.msra.mxu0 0.0
    %1628 = vmatprep.subr.mxu0 0.0
    %1629 = vmatpush1.msra.mxu0 0.0
    %1630 = vmatprep.subr.mxu0 0.0
    %1631 = vmatpush1.msra.mxu0 0.0
    %1632 = vmatprep.subr.mxu0 0.0
    %1633 = vmatpush1.msra.mxu0 0.0
    %1634 = vmatprep.subr.mxu0 0.0
    %1635 = vmatpush1.msra.mxu0 0.0
    %1636 = vmatprep.subr.mxu0 0.0
    %1637 = vmatpush1.msra.mxu0 0.0
    %1638 = vmatprep.subr.mxu0 0.0
    %1639 = vmatpush1.msra.mxu0 0.0
    %1640 = vmatprep.subr.mxu0 0.0
    %1641 = vmatpush1.msra.mxu0 0.0
    %1642 = vmatprep.mubr.f32.mxu0 0.0
    %1643 = vmatmul.mubr.f32.gmra.mrb[0].mxu0 %v1463
    %v1644 = vpop.f32.mrb[0].mxu0
    %v1645 = vadd.f32 %v1575, %v1644
    %v1646 = vpop.f32.mrb[0].mxu0
    %1647 = vdwg.mxu0
    %v1648 = vld [vmem:[#allocation2 + $0x400] sm:$0xff]
    %v1649 = vld [vmem:[#allocation2 + $0x408] sm:$0xff]
    %v1650 = vld [vmem:[#allocation2 + $0x410] sm:$0xff]
    %v1651 = vld [vmem:[#allocation2 + $0x418] sm:$0xff]
    %v1652 = vld [vmem:[#allocation2 + $0x420] sm:$0xff]
    %v1653 = vld [vmem:[#allocation2 + $0x428] sm:$0xff]
    %v1654 = vld [vmem:[#allocation2 + $0x430] sm:$0xff]
    %v1655 = vld [vmem:[#allocation2 + $0x438] sm:$0xff]
    %v1656 = vld [vmem:[#allocation2 + $0x440] sm:$0xff]
    %v1657 = vld [vmem:[#allocation2 + $0x448] sm:$0xff]
    %v1658 = vld [vmem:[#allocation2 + $0x450] sm:$0xff]
    %v1659 = vld [vmem:[#allocation2 + $0x458] sm:$0xff]
    %v1660 = vld [vmem:[#allocation2 + $0x460] sm:$0xff]
    %v1661 = vld [vmem:[#allocation2 + $0x468] sm:$0xff]
    %v1662 = vld [vmem:[#allocation2 + $0x470] sm:$0xff]
    %v1663 = vld [vmem:[#allocation2 + $0x478] sm:$0xff]
    %1664 = vmatprep.subr.mxu0 0.0
    %1665 = vmatpush1.msra.mxu0 %v1648
    %1666 = vmatprep.subr.mxu0 0.0
    %1667 = vmatpush1.msra.mxu0 %v1649
    %1668 = vmatprep.subr.mxu0 0.0
    %1669 = vmatpush1.msra.mxu0 %v1650
    %1670 = vmatprep.subr.mxu0 0.0
    %1671 = vmatpush1.msra.mxu0 %v1651
    %1672 = vmatprep.subr.mxu0 0.0
    %1673 = vmatpush1.msra.mxu0 %v1652
    %1674 = vmatprep.subr.mxu0 0.0
    %1675 = vmatpush1.msra.mxu0 %v1653
    %1676 = vmatprep.subr.mxu0 0.0
    %1677 = vmatpush1.msra.mxu0 %v1654
    %1678 = vmatprep.subr.mxu0 0.0
    %1679 = vmatpush1.msra.mxu0 %v1655
    %1680 = vmatprep.subr.mxu0 0.0
    %1681 = vmatpush1.msra.mxu0 %v1656
    %1682 = vmatprep.subr.mxu0 0.0
    %1683 = vmatpush1.msra.mxu0 %v1657
    %1684 = vmatprep.subr.mxu0 0.0
    %1685 = vmatpush1.msra.mxu0 %v1658
    %1686 = vmatprep.subr.mxu0 0.0
    %1687 = vmatpush1.msra.mxu0 %v1659
    %1688 = vmatprep.subr.mxu0 0.0
    %1689 = vmatpush1.msra.mxu0 %v1660
    %1690 = vmatprep.subr.mxu0 0.0
    %1691 = vmatpush1.msra.mxu0 %v1661
    %1692 = vmatprep.subr.mxu0 0.0
    %1693 = vmatpush1.msra.mxu0 %v1662
    %1694 = vmatprep.subr.mxu0 0.0
    %1695 = vmatpush1.msra.mxu0 %v1663
    %1696 = vmatprep.subr.mxu0 0.0
    %1697 = vmatpush1.msra.mxu0 0.0
    %1698 = vmatprep.subr.mxu0 0.0
    %1699 = vmatpush1.msra.mxu0 0.0
    %1700 = vmatprep.subr.mxu0 0.0
    %1701 = vmatpush1.msra.mxu0 0.0
    %1702 = vmatprep.subr.mxu0 0.0
    %1703 = vmatpush1.msra.mxu0 0.0
    %1704 = vmatprep.subr.mxu0 0.0
    %1705 = vmatpush1.msra.mxu0 0.0
    %1706 = vmatprep.subr.mxu0 0.0
    %1707 = vmatpush1.msra.mxu0 0.0
    %1708 = vmatprep.subr.mxu0 0.0
    %1709 = vmatpush1.msra.mxu0 0.0
    %1710 = vmatprep.subr.mxu0 0.0
    %1711 = vmatpush1.msra.mxu0 0.0
    %1712 = vmatprep.subr.mxu0 0.0
    %1713 = vmatpush1.msra.mxu0 0.0
    %1714 = vmatprep.subr.mxu0 0.0
    %1715 = vmatpush1.msra.mxu0 0.0
    %1716 = vmatprep.subr.mxu0 0.0
    %1717 = vmatpush1.msra.mxu0 0.0
    %1718 = vmatprep.subr.mxu0 0.0
    %1719 = vmatpush1.msra.mxu0 0.0
    %1720 = vmatprep.subr.mxu0 0.0
    %1721 = vmatpush1.msra.mxu0 0.0
    %1722 = vmatprep.subr.mxu0 0.0
    %1723 = vmatpush1.msra.mxu0 0.0
    %1724 = vmatprep.subr.mxu0 0.0
    %1725 = vmatpush1.msra.mxu0 0.0
    %1726 = vmatprep.subr.mxu0 0.0
    %1727 = vmatpush1.msra.mxu0 0.0
    %1728 = vmatprep.mubr.f32.mxu0 0.0
    %1729 = vmatmul.mubr.f32.gmra.mrb[0].mxu0 %v1473
    %v1730 = vpop.f32.mrb[0].mxu0
    %v1731 = vadd.f32 0.0, %v1730
    %v1732 = vpop.f32.mrb[0].mxu0
    %1733 = vdwg.mxu0
    %v1734 = vadd.f32 %v1645, %v1731
    %v1735 = vld [vmem:[#allocation2 + $0x602] sm:$0x1]
    %v1736 = vlaneseq
    %v1737 = vshrl.u32 %v1736, 7
    %v1738 = vsub.s32 0, %v1737
    %v1739 = vrot.slane %v1735, %v1738
    %v1740 = vadd.f32 %v1734, %v1739
    %v1741 = vmax.f32 %v1740, 0.0
    %v1742 = vld [vmem:[%s2 + $0x3c] sm:$0xff]
    %v1743 = vld [vmem:[%s2 + $0x44] sm:$0xff]
    %v1744 = vld [vmem:[%s2 + $0x4c] sm:$0xff]
    %v1745 = vld [vmem:[%s2 + $0x54] sm:$0xff]
    %v1746 = vld [vmem:[%s2 + $0x5c] sm:$0xff]
    %v1747 = vld [vmem:[%s2 + $0x64] sm:$0xff]
    %v1749 = vsel %vm401, %v1742, 0
    %v1752 = vsel %vm401, %v1743, 0
    %v1755 = vsel %vm401, %v1744, 0
    %v1758 = vsel %vm401, %v1745, 0
    %v1761 = vsel %vm401, %v1746, 0
    %v1764 = vsel %vm401, %v1747, 0
    %1766 = vmatprep.subr.mxu0 0.0
    %1767 = vmatpush1.msra.mxu0 %v1741
    %1768 = vmatprep.subr.mxu0 0.0
    %1769 = vmatpush1.msra.mxu0 0.0
    %1770 = vmatprep.subr.mxu0 0.0
    %1771 = vmatpush1.msra.mxu0 0.0
    %1772 = vmatprep.subr.mxu0 0.0
    %1773 = vmatpush1.msra.mxu0 0.0
    %1774 = vmatprep.subr.mxu0 0.0
    %1775 = vmatpush1.msra.mxu0 0.0
    %1776 = vmatprep.subr.mxu0 0.0
    %1777 = vmatpush1.msra.mxu0 0.0
    %1778 = vmatprep.subr.mxu0 0.0
    %1779 = vmatpush1.msra.mxu0 0.0
    %1780 = vmatprep.subr.mxu0 0.0
    %1781 = vmatpush1.msra.mxu0 0.0
    %1782 = vmatprep.subr.mxu0 0.0
    %1783 = vmatpush1.msra.mxu0 0.0
    %1784 = vmatprep.subr.mxu0 0.0
    %1785 = vmatpush1.msra.mxu0 0.0
    %1786 = vmatprep.subr.mxu0 0.0
    %1787 = vmatpush1.msra.mxu0 0.0
    %1788 = vmatprep.subr.mxu0 0.0
    %1789 = vmatpush1.msra.mxu0 0.0
    %1790 = vmatprep.subr.mxu0 0.0
    %1791 = vmatpush1.msra.mxu0 0.0
    %1792 = vmatprep.subr.mxu0 0.0
    %1793 = vmatpush1.msra.mxu0 0.0
    %1794 = vmatprep.subr.mxu0 0.0
    %1795 = vmatpush1.msra.mxu0 0.0
    %1796 = vmatprep.subr.mxu0 0.0
    %1797 = vmatpush1.msra.mxu0 0.0
    %1798 = vmatprep.subr.mxu0 0.0
    %1799 = vmatpush1.msra.mxu0 0.0
    %1800 = vmatprep.subr.mxu0 0.0
    %1801 = vmatpush1.msra.mxu0 0.0
    %1802 = vmatprep.subr.mxu0 0.0
    %1803 = vmatpush1.msra.mxu0 0.0
    %1804 = vmatprep.subr.mxu0 0.0
    %1805 = vmatpush1.msra.mxu0 0.0
    %1806 = vmatprep.subr.mxu0 0.0
    %1807 = vmatpush1.msra.mxu0 0.0
    %1808 = vmatprep.subr.mxu0 0.0
    %1809 = vmatpush1.msra.mxu0 0.0
    %1810 = vmatprep.subr.mxu0 0.0
    %1811 = vmatpush1.msra.mxu0 0.0
    %1812 = vmatprep.subr.mxu0 0.0
    %1813 = vmatpush1.msra.mxu0 0.0
    %1814 = vmatprep.subr.mxu0 0.0
    %1815 = vmatpush1.msra.mxu0 0.0
    %1816 = vmatprep.subr.mxu0 0.0
    %1817 = vmatpush1.msra.mxu0 0.0
    %1818 = vmatprep.subr.mxu0 0.0
    %1819 = vmatpush1.msra.mxu0 0.0
    %1820 = vmatprep.subr.mxu0 0.0
    %1821 = vmatpush1.msra.mxu0 0.0
    %1822 = vmatprep.subr.mxu0 0.0
    %1823 = vmatpush1.msra.mxu0 0.0
    %1824 = vmatprep.subr.mxu0 0.0
    %1825 = vmatpush1.msra.mxu0 0.0
    %1826 = vmatprep.subr.mxu0 0.0
    %1827 = vmatpush1.msra.mxu0 0.0
    %1828 = vmatprep.subr.mxu0 0.0
    %1829 = vmatpush1.msra.mxu0 0.0
    %1830 = vmatprep.mubr.f32.mxu0 0.0
    %1831 = vmatmul.mubr.f32.gmra.mrb[0].mxu0 %v1749
    %v1832 = vpop.f32.mrb[0].mxu0
    %v1833 = vadd.f32 0.0, %v1832
    %v1834 = vpop.f32.mrb[0].mxu0
    %1835 = vmatprep.mubr.f32.mxu0 0.0
    %1836 = vmatmul.mubr.f32.gmra.mrb[0].mxu0 %v1752
    %v1837 = vpop.f32.mrb[0].mxu0
    %v1838 = vadd.f32 0.0, %v1837
    %v1839 = vpop.f32.mrb[0].mxu0
    %1840 = vmatprep.mubr.f32.mxu0 0.0
    %1841 = vmatmul.mubr.f32.gmra.mrb[0].mxu0 %v1755
    %v1842 = vpop.f32.mrb[0].mxu0
    %v1843 = vadd.f32 0.0, %v1842
    %v1844 = vpop.f32.mrb[0].mxu0
    %1845 = vmatprep.mubr.f32.mxu0 0.0
    %1846 = vmatmul.mubr.f32.gmra.mrb[0].mxu0 %v1758
    %v1847 = vpop.f32.mrb[0].mxu0
    %v1848 = vadd.f32 0.0, %v1847
    %v1849 = vpop.f32.mrb[0].mxu0
    %1850 = vmatprep.mubr.f32.mxu0 0.0
    %1851 = vmatmul.mubr.f32.gmra.mrb[0].mxu0 %v1761
    %v1852 = vpop.f32.mrb[0].mxu0
    %v1853 = vadd.f32 0.0, %v1852
    %v1854 = vpop.f32.mrb[0].mxu0
    %1855 = vmatprep.mubr.f32.mxu0 0.0
    %1856 = vmatmul.mubr.f32.gmra.mrb[0].mxu0 %v1764
    %v1857 = vpop.f32.mrb[0].mxu0
    %v1858 = vadd.f32 0.0, %v1857
    %v1859 = vpop.f32.mrb[0].mxu0
    %1860 = vdwg.mxu0
    %v1861 = vld [vmem:[#allocation2 + $0x480] sm:$0xff]
    %v1862 = vld [vmem:[#allocation2 + $0x488] sm:$0xff]
    %v1863 = vld [vmem:[#allocation2 + $0x490] sm:$0xff]
    %v1864 = vld [vmem:[#allocation2 + $0x498] sm:$0xff]
    %v1865 = vld [vmem:[#allocation2 + $0x4a0] sm:$0xff]
    %v1866 = vld [vmem:[#allocation2 + $0x4a8] sm:$0xff]
    %v1867 = vld [vmem:[#allocation2 + $0x4b0] sm:$0xff]
    %v1868 = vld [vmem:[#allocation2 + $0x4b8] sm:$0xff]
    %v1869 = vld [vmem:[#allocation2 + $0x4c0] sm:$0xff]
    %v1870 = vld [vmem:[#allocation2 + $0x4c8] sm:$0xff]
    %v1871 = vld [vmem:[#allocation2 + $0x4d0] sm:$0xff]
    %v1872 = vld [vmem:[#allocation2 + $0x4d8] sm:$0xff]
    %v1873 = vld [vmem:[#allocation2 + $0x4e0] sm:$0xff]
    %v1874 = vld [vmem:[#allocation2 + $0x4e8] sm:$0xff]
    %v1875 = vld [vmem:[#allocation2 + $0x4f0] sm:$0xff]
    %v1876 = vld [vmem:[#allocation2 + $0x4f8] sm:$0xff]
    %v1877 = vld [vmem:[#allocation2 + $0x500] sm:$0xff]
    %v1878 = vld [vmem:[#allocation2 + $0x508] sm:$0xff]
    %v1879 = vld [vmem:[#allocation2 + $0x510] sm:$0xff]
    %v1880 = vld [vmem:[#allocation2 + $0x518] sm:$0xff]
    %v1881 = vld [vmem:[#allocation2 + $0x520] sm:$0xff]
    %v1882 = vld [vmem:[#allocation2 + $0x528] sm:$0xff]
    %v1883 = vld [vmem:[#allocation2 + $0x530] sm:$0xff]
    %v1884 = vld [vmem:[#allocation2 + $0x538] sm:$0xff]
    %v1885 = vld [vmem:[#allocation2 + $0x540] sm:$0xff]
    %v1886 = vld [vmem:[#allocation2 + $0x548] sm:$0xff]
    %v1887 = vld [vmem:[#allocation2 + $0x550] sm:$0xff]
    %v1888 = vld [vmem:[#allocation2 + $0x558] sm:$0xff]
    %v1889 = vld [vmem:[#allocation2 + $0x560] sm:$0xff]
    %v1890 = vld [vmem:[#allocation2 + $0x568] sm:$0xff]
    %v1891 = vld [vmem:[#allocation2 + $0x570] sm:$0xff]
    %v1892 = vld [vmem:[#allocation2 + $0x578] sm:$0xff]
    %1893 = vmatprep.subr.mxu0 0.0
    %1894 = vmatpush1.msra.mxu0 %v1877
    %1895 = vmatprep.subr.mxu0 0.0
    %1896 = vmatpush1.msra.mxu0 %v1878
    %1897 = vmatprep.subr.mxu0 0.0
    %1898 = vmatpush1.msra.mxu0 %v1879
    %1899 = vmatprep.subr.mxu0 0.0
    %1900 = vmatpush1.msra.mxu0 %v1880
    %1901 = vmatprep.subr.mxu0 0.0
    %1902 = vmatpush1.msra.mxu0 %v1881
    %1903 = vmatprep.subr.mxu0 0.0
    %1904 = vmatpush1.msra.mxu0 %v1882
    %1905 = vmatprep.subr.mxu0 0.0
    %1906 = vmatpush1.msra.mxu0 %v1883
    %1907 = vmatprep.subr.mxu0 0.0
    %1908 = vmatpush1.msra.mxu0 %v1884
    %1909 = vmatprep.subr.mxu0 0.0
    %1910 = vmatpush1.msra.mxu0 %v1885
    %1911 = vmatprep.subr.mxu0 0.0
    %1912 = vmatpush1.msra.mxu0 %v1886
    %1913 = vmatprep.subr.mxu0 0.0
    %1914 = vmatpush1.msra.mxu0 %v1887
    %1915 = vmatprep.subr.mxu0 0.0
    %1916 = vmatpush1.msra.mxu0 %v1888
    %1917 = vmatprep.subr.mxu0 0.0
    %1918 = vmatpush1.msra.mxu0 %v1889
    %1919 = vmatprep.subr.mxu0 0.0
    %1920 = vmatpush1.msra.mxu0 %v1890
    %1921 = vmatprep.subr.mxu0 0.0
    %1922 = vmatpush1.msra.mxu0 %v1891
    %1923 = vmatprep.subr.mxu0 0.0
    %1924 = vmatpush1.msra.mxu0 %v1892
    %1925 = vmatprep.subr.mxu0 0.0
    %1926 = vmatpush1.msra.mxu0 0.0
    %1927 = vmatprep.subr.mxu0 0.0
    %1928 = vmatpush1.msra.mxu0 0.0
    %1929 = vmatprep.subr.mxu0 0.0
    %1930 = vmatpush1.msra.mxu0 0.0
    %1931 = vmatprep.subr.mxu0 0.0
    %1932 = vmatpush1.msra.mxu0 0.0
    %1933 = vmatprep.subr.mxu0 0.0
    %1934 = vmatpush1.msra.mxu0 0.0
    %1935 = vmatprep.subr.mxu0 0.0
    %1936 = vmatpush1.msra.mxu0 0.0
    %1937 = vmatprep.subr.mxu0 0.0
    %1938 = vmatpush1.msra.mxu0 0.0
    %1939 = vmatprep.subr.mxu0 0.0
    %1940 = vmatpush1.msra.mxu0 0.0
    %1941 = vmatprep.subr.mxu0 0.0
    %1942 = vmatpush1.msra.mxu0 0.0
    %1943 = vmatprep.subr.mxu0 0.0
    %1944 = vmatpush1.msra.mxu0 0.0
    %1945 = vmatprep.subr.mxu0 0.0
    %1946 = vmatpush1.msra.mxu0 0.0
    %1947 = vmatprep.subr.mxu0 0.0
    %1948 = vmatpush1.msra.mxu0 0.0
    %1949 = vmatprep.subr.mxu0 0.0
    %1950 = vmatpush1.msra.mxu0 0.0
    %1951 = vmatprep.subr.mxu0 0.0
    %1952 = vmatpush1.msra.mxu0 0.0
    %1953 = vmatprep.subr.mxu0 0.0
    %1954 = vmatpush1.msra.mxu0 0.0
    %1955 = vmatprep.subr.mxu0 0.0
    %1956 = vmatpush1.msra.mxu0 0.0
    %1957 = vmatprep.mubr.f32.mxu0 0.0
    %1958 = vmatmul.mubr.f32.gmra.mrb[0].mxu0 %v1843
    %v1959 = vpop.f32.mrb[0].mxu0
    %v1960 = vadd.f32 0.0, %v1959
    %v1961 = vpop.f32.mrb[0].mxu0
    %1962 = vmatprep.mubr.f32.mxu0 0.0
    %1963 = vmatmul.mubr.f32.gmra.mrb[0].mxu0 %v1848
    %v1964 = vpop.f32.mrb[0].mxu0
    %v1965 = vadd.f32 0.0, %v1964
    %v1966 = vpop.f32.mrb[0].mxu0
    %1967 = vdwg.mxu0
    %1968 = vmatprep.subr.mxu0 0.0
    %1969 = vmatpush1.msra.mxu0 %v1861
    %1970 = vmatprep.subr.mxu0 0.0
    %1971 = vmatpush1.msra.mxu0 %v1862
    %1972 = vmatprep.subr.mxu0 0.0
    %1973 = vmatpush1.msra.mxu0 %v1863
    %1974 = vmatprep.subr.mxu0 0.0
    %1975 = vmatpush1.msra.mxu0 %v1864
    %1976 = vmatprep.subr.mxu0 0.0
    %1977 = vmatpush1.msra.mxu0 %v1865
    %1978 = vmatprep.subr.mxu0 0.0
    %1979 = vmatpush1.msra.mxu0 %v1866
    %1980 = vmatprep.subr.mxu0 0.0
    %1981 = vmatpush1.msra.mxu0 %v1867
    %1982 = vmatprep.subr.mxu0 0.0
    %1983 = vmatpush1.msra.mxu0 %v1868
    %1984 = vmatprep.subr.mxu0 0.0
    %1985 = vmatpush1.msra.mxu0 %v1869
    %1986 = vmatprep.subr.mxu0 0.0
    %1987 = vmatpush1.msra.mxu0 %v1870
    %1988 = vmatprep.subr.mxu0 0.0
    %1989 = vmatpush1.msra.mxu0 %v1871
    %1990 = vmatprep.subr.mxu0 0.0
    %1991 = vmatpush1.msra.mxu0 %v1872
    %1992 = vmatprep.subr.mxu0 0.0
    %1993 = vmatpush1.msra.mxu0 %v1873
    %1994 = vmatprep.subr.mxu0 0.0
    %1995 = vmatpush1.msra.mxu0 %v1874
    %1996 = vmatprep.subr.mxu0 0.0
    %1997 = vmatpush1.msra.mxu0 %v1875
    %1998 = vmatprep.subr.mxu0 0.0
    %1999 = vmatpush1.msra.mxu0 %v1876
    %2000 = vmatprep.subr.mxu0 0.0
    %2001 = vmatpush1.msra.mxu0 0.0
    %2002 = vmatprep.subr.mxu0 0.0
    %2003 = vmatpush1.msra.mxu0 0.0
    %2004 = vmatprep.subr.mxu0 0.0
    %2005 = vmatpush1.msra.mxu0 0.0
    %2006 = vmatprep.subr.mxu0 0.0
    %2007 = vmatpush1.msra.mxu0 0.0
    %2008 = vmatprep.subr.mxu0 0.0
    %2009 = vmatpush1.msra.mxu0 0.0
    %2010 = vmatprep.subr.mxu0 0.0
    %2011 = vmatpush1.msra.mxu0 0.0
    %2012 = vmatprep.subr.mxu0 0.0
    %2013 = vmatpush1.msra.mxu0 0.0
    %2014 = vmatprep.subr.mxu0 0.0
    %2015 = vmatpush1.msra.mxu0 0.0
    %2016 = vmatprep.subr.mxu0 0.0
    %2017 = vmatpush1.msra.mxu0 0.0
    %2018 = vmatprep.subr.mxu0 0.0
    %2019 = vmatpush1.msra.mxu0 0.0
    %2020 = vmatprep.subr.mxu0 0.0
    %2021 = vmatpush1.msra.mxu0 0.0
    %2022 = vmatprep.subr.mxu0 0.0
    %2023 = vmatpush1.msra.mxu0 0.0
    %2024 = vmatprep.subr.mxu0 0.0
    %2025 = vmatpush1.msra.mxu0 0.0
    %2026 = vmatprep.subr.mxu0 0.0
    %2027 = vmatpush1.msra.mxu0 0.0
    %2028 = vmatprep.subr.mxu0 0.0
    %2029 = vmatpush1.msra.mxu0 0.0
    %2030 = vmatprep.subr.mxu0 0.0
    %2031 = vmatpush1.msra.mxu0 0.0
    %2032 = vmatprep.mubr.f32.mxu0 0.0
    %2033 = vmatmul.mubr.f32.gmra.mrb[0].mxu0 %v1833
    %v2034 = vpop.f32.mrb[0].mxu0
    %v2035 = vadd.f32 %v1960, %v2034
    %v2036 = vpop.f32.mrb[0].mxu0
    %2037 = vmatprep.mubr.f32.mxu0 0.0
    %2038 = vmatmul.mubr.f32.gmra.mrb[0].mxu0 %v1838
    %v2039 = vpop.f32.mrb[0].mxu0
    %v2040 = vadd.f32 %v1965, %v2039
    %v2041 = vpop.f32.mrb[0].mxu0
    %2042 = vdwg.mxu0
    %v2043 = vld [vmem:[#allocation2 + $0x580] sm:$0xff]
    %v2044 = vld [vmem:[#allocation2 + $0x588] sm:$0xff]
    %v2045 = vld [vmem:[#allocation2 + $0x590] sm:$0xff]
    %v2046 = vld [vmem:[#allocation2 + $0x598] sm:$0xff]
    %v2047 = vld [vmem:[#allocation2 + $0x5a0] sm:$0xff]
    %v2048 = vld [vmem:[#allocation2 + $0x5a8] sm:$0xff]
    %v2049 = vld [vmem:[#allocation2 + $0x5b0] sm:$0xff]
    %v2050 = vld [vmem:[#allocation2 + $0x5b8] sm:$0xff]
    %v2051 = vld [vmem:[#allocation2 + $0x5c0] sm:$0xff]
    %v2052 = vld [vmem:[#allocation2 + $0x5c8] sm:$0xff]
    %v2053 = vld [vmem:[#allocation2 + $0x5d0] sm:$0xff]
    %v2054 = vld [vmem:[#allocation2 + $0x5d8] sm:$0xff]
    %v2055 = vld [vmem:[#allocation2 + $0x5e0] sm:$0xff]
    %v2056 = vld [vmem:[#allocation2 + $0x5e8] sm:$0xff]
    %v2057 = vld [vmem:[#allocation2 + $0x5f0] sm:$0xff]
    %v2058 = vld [vmem:[#allocation2 + $0x5f8] sm:$0xff]
    %2059 = vmatprep.subr.mxu0 0.0
    %2060 = vmatpush1.msra.mxu0 %v2043
    %2061 = vmatprep.subr.mxu0 0.0
    %2062 = vmatpush1.msra.mxu0 %v2044
    %2063 = vmatprep.subr.mxu0 0.0
    %2064 = vmatpush1.msra.mxu0 %v2045
    %2065 = vmatprep.subr.mxu0 0.0
    %2066 = vmatpush1.msra.mxu0 %v2046
    %2067 = vmatprep.subr.mxu0 0.0
    %2068 = vmatpush1.msra.mxu0 %v2047
    %2069 = vmatprep.subr.mxu0 0.0
    %2070 = vmatpush1.msra.mxu0 %v2048
    %2071 = vmatprep.subr.mxu0 0.0
    %2072 = vmatpush1.msra.mxu0 %v2049
    %2073 = vmatprep.subr.mxu0 0.0
    %2074 = vmatpush1.msra.mxu0 %v2050
    %2075 = vmatprep.subr.mxu0 0.0
    %2076 = vmatpush1.msra.mxu0 %v2051
    %2077 = vmatprep.subr.mxu0 0.0
    %2078 = vmatpush1.msra.mxu0 %v2052
    %2079 = vmatprep.subr.mxu0 0.0
    %2080 = vmatpush1.msra.mxu0 %v2053
    %2081 = vmatprep.subr.mxu0 0.0
    %2082 = vmatpush1.msra.mxu0 %v2054
    %2083 = vmatprep.subr.mxu0 0.0
    %2084 = vmatpush1.msra.mxu0 %v2055
    %2085 = vmatprep.subr.mxu0 0.0
    %2086 = vmatpush1.msra.mxu0 %v2056
    %2087 = vmatprep.subr.mxu0 0.0
    %2088 = vmatpush1.msra.mxu0 %v2057
    %2089 = vmatprep.subr.mxu0 0.0
    %2090 = vmatpush1.msra.mxu0 %v2058
    %2091 = vmatprep.subr.mxu0 0.0
    %2092 = vmatpush1.msra.mxu0 0.0
    %2093 = vmatprep.subr.mxu0 0.0
    %2094 = vmatpush1.msra.mxu0 0.0
    %2095 = vmatprep.subr.mxu0 0.0
    %2096 = vmatpush1.msra.mxu0 0.0
    %2097 = vmatprep.subr.mxu0 0.0
    %2098 = vmatpush1.msra.mxu0 0.0
    %2099 = vmatprep.subr.mxu0 0.0
    %2100 = vmatpush1.msra.mxu0 0.0
    %2101 = vmatprep.subr.mxu0 0.0
    %2102 = vmatpush1.msra.mxu0 0.0
    %2103 = vmatprep.subr.mxu0 0.0
    %2104 = vmatpush1.msra.mxu0 0.0
    %2105 = vmatprep.subr.mxu0 0.0
    %2106 = vmatpush1.msra.mxu0 0.0
    %2107 = vmatprep.subr.mxu0 0.0
    %2108 = vmatpush1.msra.mxu0 0.0
    %2109 = vmatprep.subr.mxu0 0.0
    %2110 = vmatpush1.msra.mxu0 0.0
    %2111 = vmatprep.subr.mxu0 0.0
    %2112 = vmatpush1.msra.mxu0 0.0
    %2113 = vmatprep.subr.mxu0 0.0
    %2114 = vmatpush1.msra.mxu0 0.0
    %2115 = vmatprep.subr.mxu0 0.0
    %2116 = vmatpush1.msra.mxu0 0.0
    %2117 = vmatprep.subr.mxu0 0.0
    %2118 = vmatpush1.msra.mxu0 0.0
    %2119 = vmatprep.subr.mxu0 0.0
    %2120 = vmatpush1.msra.mxu0 0.0
    %2121 = vmatprep.subr.mxu0 0.0
    %2122 = vmatpush1.msra.mxu0 0.0
    %2123 = vmatprep.mubr.f32.mxu0 0.0
    %2124 = vmatmul.mubr.f32.gmra.mrb[0].mxu0 %v1853
    %v2125 = vpop.f32.mrb[0].mxu0
    %v2126 = vadd.f32 0.0, %v2125
    %v2127 = vpop.f32.mrb[0].mxu0
    %2128 = vmatprep.mubr.f32.mxu0 0.0
    %2129 = vmatmul.mubr.f32.gmra.mrb[0].mxu0 %v1858
    %v2130 = vpop.f32.mrb[0].mxu0
    %v2131 = vadd.f32 0.0, %v2130
    %v2132 = vpop.f32.mrb[0].mxu0
    %2133 = vdwg.mxu0
    %v2134 = vadd.f32 %v2035, %v2126
    %v2135 = vadd.f32 %v2040, %v2131
    %v2136 = vld [vmem:[#allocation2 + $0x603] sm:$0x1]
    %v2137 = vlaneseq
    %v2138 = vshrl.u32 %v2137, 7
    %v2139 = vsub.s32 0, %v2138
    %v2140 = vrot.slane %v2136, %v2139
    %v2141 = vadd.f32 %v2134, %v2140
    %v2142 = vadd.f32 %v2135, %v2140
    %v2143 = vsub.f32 0.0, %v2141
    %v2144 = vsub.f32 0.0, %v2142
    %v2145 = vmul.f32 %v2143, 1.442695
    %v2146 = vpow.pop %v2145
    %v2147 = vmul.f32 %v2144, 1.442695
    %v2148 = vpow.pop %v2147
    %v2149 = vadd.f32 %v2146, 1.0
    %v2150 = vadd.f32 %v2148, 1.0
    %v2151 = vrcp.pop %v2149
    %v2152 = vrcp.pop %v2150
    %2153 = vst [vmem:[%s6] sm:$0xff] %v2151
    %2154 = vst [vmem:[%s6 + $0x8] sm:$0xff] %v2152
    // Predicated region
    $region30: #{cae_apply.1} parent=1 // pred_check
      _
    $region31: #{cae_apply.1} parent=1 // pred_check_branch
      %2156 = sbr.rel (0) target = $region33
    $region32: #{cae_apply.1} parent=1 // pred_region
      _
    $region33: #{cae_apply.1} parent=1 // pred_fallthru
      _
    // Predicated region
    $region34: #{cae_apply.1} parent=1 // pred_check
      _
    $region35: #{cae_apply.1} parent=1 // pred_check_branch
      %2158 = sbr.rel (0) target = $region37
    $region36: #{cae_apply.1} parent=1 // pred_region
      _
    $region37: #{cae_apply.1} parent=1 // pred_fallthru
      _
    %2159 = vsyncpa [#allocation3], 1

</llo_original>
